<compile_context>
chip_gen: v5e
topology: v5e:2x2
jax: 0.10.0
libtpu: 0.0.40
codegen_flags: <defaults>
</compile_context>

<pallas_src>
import functools

import jax
import jax.numpy as jnp
from jax.experimental import pallas as pl
from jax.experimental.pallas import tpu as pltpu


def _layer_norm(x, gamma, beta, eps=1e-5):
    # x: (T, H) f32; gamma/beta: (1, H) f32. Biased variance, like nn.LayerNorm.
    mean = jnp.mean(x, axis=-1, keepdims=True)
    xc = x - mean
    var = jnp.mean(xc * xc, axis=-1, keepdims=True)
    return xc * jax.lax.rsqrt(var + eps) * gamma + beta


def _decoder_kernel(n_heads, heads_dim,
                    x_ref, k_ref, v_ref,
                    wq_ref, bq_ref, wo_ref, bo_ref,
                    g1_ref, be1_ref,
                    w1_ref, b1_ref, w2_ref, b2_ref,
                    g2_ref, be2_ref,
                    o_ref):
    # Grid: (batch, query_block).  x block: (1, tq, H) f32.
    # k_ref / v_ref blocks: (1, nh, S, hd) bf16, head-major, precomputed outside.
    tq = x_ref.shape[1]
    H = n_heads * heads_dim
    inv_scale = jnp.float32(1.0 / (heads_dim ** 0.5))

    xq = x_ref[0]                                                # (tq, H) f32

    # ---- Q projection (bf16 MXU operands, f32 accumulate) -------------------
    q = jnp.dot(xq.astype(jnp.bfloat16), wq_ref[...],
                preferred_element_type=jnp.float32) + bq_ref[...]
    q = q * inv_scale            # fold 1/sqrt(heads_dim) into q (one VPU mul)

    qh = q.astype(jnp.bfloat16).reshape(tq, n_heads, heads_dim).transpose(1, 0, 2)
    kh = k_ref[0]                                                # (nh, S, hd) bf16
    vh = v_ref[0]                                                # (nh, S, hd) bf16

    # ---- Head-batched attention ---------------------------------------------
    energy = jnp.einsum('hqd,hkd->hqk', qh, kh,
                        preferred_element_type=jnp.float32)      # (nh, tq, S)
    m = jnp.max(energy, axis=-1, keepdims=True)
    # exp stays f32 (safe on all chips); switch to bf16 only if EUP-bound on v6e/v7x.
    e = jnp.exp(energy - m)
    denom = jnp.sum(e, axis=-1, keepdims=True)                   # (nh, tq, 1)

    # Post-PV normalization: scale the (nh, tq, hd) result instead of the
    # (nh, tq, S) probabilities -> S/hd fewer VPU multiplies, one fewer temp.
    ctx = jnp.einsum('hqk,hkd->hqd', e.astype(jnp.bfloat16), vh,
                     preferred_element_type=jnp.float32)         # (nh, tq, hd)
    ctx = ctx * pl.reciprocal(denom, approx=True)

    context = ctx.transpose(1, 0, 2).reshape(tq, H)              # (tq, H) f32
    attn_out = jnp.dot(context.astype(jnp.bfloat16), wo_ref[...],
                       preferred_element_type=jnp.float32) + bo_ref[...]

    # ---- Residual + LayerNorm 1 ---------------------------------------------
    x1 = _layer_norm(xq + attn_out, g1_ref[...], be1_ref[...])

    # ---- Feed-forward (ReLU) -------------------------------------------------
    # TODO(synk): for v7x (64 MiB VMEM) with large H/FF, stream w1/w2 in FF-dim
    # chunks (emit_pipeline) instead of holding them fully resident.
    h1 = jnp.dot(x1.astype(jnp.bfloat16), w1_ref[...],
                 preferred_element_type=jnp.float32) + b1_ref[...]
    h1 = jnp.maximum(h1, 0.0)
    ff_out = jnp.dot(h1.astype(jnp.bfloat16), w2_ref[...],
                     preferred_element_type=jnp.float32) + b2_ref[...]

    # ---- Residual + LayerNorm 2 ---------------------------------------------
    x2 = _layer_norm(x1 + ff_out, g2_ref[...], be2_ref[...])
    o_ref[0] = x2.astype(o_ref.dtype)


def _kernel_vmem_need(tq, S, H, FF, n_heads, weight_bytes):
    """Conservative per-step VMEM estimate (bytes) including softmax temps."""
    hd = H // n_heads
    x_blk = 2 * tq * H * 4                      # x block, double-buffered f32
    o_blk = 2 * tq * H * 4                      # out block, double-buffered f32
    kv_blk = 2 * 2 * (n_heads * S * hd) * 2     # K + V bf16 blocks, double-buffered
    softmax = 3 * n_heads * tq * S * 4          # energy / exp / bf16 cast temps
    ffn = tq * FF * (4 + 2)                     # h1 f32 + bf16 cast
    misc = 6 * tq * H * 4                       # q, context, residual/LN temps
    return weight_bytes + x_blk + o_blk + kv_blk + softmax + ffn + misc


def _pick_q_block(S, max_tq, need_fn, budget):
    """Largest S-divisible q-block <= max_tq whose VMEM estimate fits budget."""
    cands = [t for t in range(min(S, max_tq), 0, -1)
             if S % t == 0 and (t % 8 == 0 or t == S)]
    for t in cands:
        if need_fn(t) <= budget:
            return t
    # TODO(synk): for very large, awkwardly-sized S, pad S instead of falling
    # back to the smallest divisor here.
    return cands[-1]


def prepare_params(params):
    """One-time parameter prep: cast matmul weights to bf16 (MXU operands)."""
    bf = jnp.bfloat16
    p = dict(params)
    for name in ("wq", "wk", "wv", "wo", "w1", "w2"):
        p[name] = p[name].astype(bf)
    return p


def transformer_decoder(x, params, *, n_heads, q_block=256):
    """x: (B, S, H) float32. params: output of prepare_params(init_params(...))."""
    B, S, H = x.shape
    assert H % n_heads == 0
    heads_dim = H // n_heads
    FF = params["w1"].shape[1]

    # ---- K/V projection hoisted out of the kernel (plain XLA batched matmul),
    # stored head-major bf16 so the kernel never relayouts K/V per q-block.
    xb = x.astype(jnp.bfloat16)

    def proj_heads(w, b):
        y = jnp.einsum('bsh,hf->bsf', xb, w,
                       preferred_element_type=jnp.float32) + b
        y = y.reshape(B, S, n_heads, heads_dim).transpose(0, 2, 1, 3)
        return y.astype(jnp.bfloat16)                     # (B, nh, S, hd)

    k_hm = proj_heads(params["wk"], params["bk"])
    v_hm = proj_heads(params["wv"], params["bv"])

    # Kernel-resident weights (never-changing -> whole-array VMEM, no blocking).
    ordered = [
        params["wq"], params["bq"],
        params["wo"], params["bo"],
        params["ln1_g"], params["ln1_b"],
        params["w1"], params["b1"],
        params["w2"], params["b2"],
        params["ln2_g"], params["ln2_b"],
    ]
    weight_bytes = sum(int(p.size) * p.dtype.itemsize for p in ordered)
    w_spec = pl.BlockSpec(memory_space=pltpu.MemorySpace.VMEM)

    try:
        phys = int(pltpu.get_tpu_info().vmem_capacity_bytes)
    except Exception:
        phys = 64 * 1024 * 1024
    budget = int(phys * 0.8)

    need_fn = lambda t: _kernel_vmem_need(t, S, H, FF, n_heads, weight_bytes)
    tq = _pick_q_block(S, q_block, need_fn, budget)
    nq = S // tq
    need = need_fn(tq)
    vmem_limit = int(min(max(32 << 20, need + (16 << 20)), int(phys * 0.9)))

    kernel = functools.partial(_decoder_kernel, n_heads, heads_dim)

    return pl.pallas_call(
        kernel,
        out_shape=jax.ShapeDtypeStruct((B, S, H), x.dtype),
        grid_spec=pltpu.PrefetchScalarGridSpec(
            num_scalar_prefetch=0,
            grid=(B, nq),
            in_specs=[
                pl.BlockSpec((1, tq, H), lambda b, q: (b, q, 0)),           # x
                pl.BlockSpec((1, n_heads, S, heads_dim),
                             lambda b, q: (b, 0, 0, 0)),                    # K
                pl.BlockSpec((1, n_heads, S, heads_dim),
                             lambda b, q: (b, 0, 0, 0)),                    # V
            ] + [w_spec] * len(ordered),
            out_specs=pl.BlockSpec((1, tq, H), lambda b, q: (b, q, 0)),
        ),
        compiler_params=pltpu.CompilerParams(
            # No cross-iteration scratch dependency -> both axes parallel
            # (lets v7x's two TensorCores shard batch AND query blocks).
            dimension_semantics=("parallel", "parallel"),
            vmem_limit_bytes=vmem_limit),
    )(x, k_hm, v_hm, *ordered)
    # TODO(synk): for very long S, replace the full-row softmax with an
    # online-softmax (flash-style) loop over K/V blocks to bound the
    # (nh, tq, S) f32 temporaries on v7x.


def init_params(key, hidden_dim, ff_dim):
    keys = jax.random.split(key, 8)
    s_h = 1.0 / jnp.sqrt(hidden_dim)
    s_f = 1.0 / jnp.sqrt(ff_dim)

    def lin(k, fan_in, fan_out, scale):
        # stored as (in, out) so kernel does x @ W + b (== PyTorch x @ W.T + b)
        return jax.random.uniform(k, (fan_in, fan_out), jnp.float32, -scale, scale)

    return {
        "wq": lin(keys[0], hidden_dim, hidden_dim, s_h),
        "bq": jnp.zeros((1, hidden_dim), jnp.float32),
        "wk": lin(keys[1], hidden_dim, hidden_dim, s_h),
        "bk": jnp.zeros((1, hidden_dim), jnp.float32),
        "wv": lin(keys[2], hidden_dim, hidden_dim, s_h),
        "bv": jnp.zeros((1, hidden_dim), jnp.float32),
        "wo": lin(keys[3], hidden_dim, hidden_dim, s_h),
        "bo": jnp.zeros((1, hidden_dim), jnp.float32),
        "ln1_g": jnp.ones((1, hidden_dim), jnp.float32),
        "ln1_b": jnp.zeros((1, hidden_dim), jnp.float32),
        "w1": lin(keys[4], hidden_dim, ff_dim, s_h),
        "b1": jax.random.uniform(keys[5], (1, ff_dim), jnp.float32, -s_h, s_h),
        "w2": lin(keys[6], ff_dim, hidden_dim, s_f),
        "b2": jax.random.uniform(keys[7], (1, hidden_dim), jnp.float32, -s_f, s_f),
        "ln2_g": jnp.ones((1, hidden_dim), jnp.float32),
        "ln2_b": jnp.zeros((1, hidden_dim), jnp.float32),
    }


if __name__ == "__main__":
    # Small shapes consistent with the module: batch=2, seq=8, hidden=32,
    # heads=4, ff=64.
    B, S, H, NH, FF = 2, 8, 32, 4, 64

    key = jax.random.PRNGKey(0)
    kx, kp = jax.random.split(key)
    x = jax.random.normal(kx, (B, S, H), jnp.float32)
    params = prepare_params(init_params(kp, H, FF))   # bf16 cast happens ONCE here

    out = transformer_decoder(x, params, n_heads=NH)
    out = jax.block_until_ready(out)
    assert out.shape == (B, S, H) and out.dtype == jnp.float32
    # TODO(synk): dropout layers are identity (eval mode); no RNG dropout implemented.
    print("KERNEL_OK")
</pallas_src>

<mosaic_0001>
module attributes {stable_mosaic.version = 11 : i64} {
  func.func @_decoder_kernel(%arg0: i32, %arg1: i32, %arg2: memref<1x8x32xf32, #tpu.memory_space<vmem>>, %arg3: memref<1x4x8x8xbf16, #tpu.memory_space<vmem>>, %arg4: memref<1x4x8x8xbf16, #tpu.memory_space<vmem>>, %arg5: memref<32x32xbf16, #tpu.memory_space<vmem>>, %arg6: memref<1x32xf32, #tpu.memory_space<vmem>>, %arg7: memref<32x32xbf16, #tpu.memory_space<vmem>>, %arg8: memref<1x32xf32, #tpu.memory_space<vmem>>, %arg9: memref<1x32xf32, #tpu.memory_space<vmem>>, %arg10: memref<1x32xf32, #tpu.memory_space<vmem>>, %arg11: memref<32x64xbf16, #tpu.memory_space<vmem>>, %arg12: memref<1x64xf32, #tpu.memory_space<vmem>>, %arg13: memref<64x32xbf16, #tpu.memory_space<vmem>>, %arg14: memref<1x32xf32, #tpu.memory_space<vmem>>, %arg15: memref<1x32xf32, #tpu.memory_space<vmem>>, %arg16: memref<1x32xf32, #tpu.memory_space<vmem>>, %arg17: memref<1x8x32xf32, #tpu.memory_space<vmem>>) attributes {dimension_semantics = [#tpu.dimension_semantics<parallel>, #tpu.dimension_semantics<parallel>], iteration_bounds = array<i64: 2, 1>, scalar_prefetch = 0 : i64, scratch_operands = 0 : i64, tpu.core_type = #tpu.core_type<tc>, window_params = [{transform_indices = @transform_0, window_bounds = array<i64: 1, 8, 32>}, {transform_indices = @transform_1, window_bounds = array<i64: 1, 4, 8, 8>}, {transform_indices = @transform_2, window_bounds = array<i64: 1, 4, 8, 8>}, {pipeline_mode = #tpu.pipeline_mode<synchronous>, transform_indices = @transform_3, window_bounds = array<i64: 32, 32>}, {pipeline_mode = #tpu.pipeline_mode<synchronous>, transform_indices = @transform_4, window_bounds = array<i64: 1, 32>}, {pipeline_mode = #tpu.pipeline_mode<synchronous>, transform_indices = @transform_5, window_bounds = array<i64: 32, 32>}, {pipeline_mode = #tpu.pipeline_mode<synchronous>, transform_indices = @transform_6, window_bounds = array<i64: 1, 32>}, {pipeline_mode = #tpu.pipeline_mode<synchronous>, transform_indices = @transform_7, window_bounds = array<i64: 1, 32>}, {pipeline_mode = #tpu.pipeline_mode<synchronous>, transform_indices = @transform_8, window_bounds = array<i64: 1, 32>}, {pipeline_mode = #tpu.pipeline_mode<synchronous>, transform_indices = @transform_9, window_bounds = array<i64: 32, 64>}, {pipeline_mode = #tpu.pipeline_mode<synchronous>, transform_indices = @transform_10, window_bounds = array<i64: 1, 64>}, {pipeline_mode = #tpu.pipeline_mode<synchronous>, transform_indices = @transform_11, window_bounds = array<i64: 64, 32>}, {pipeline_mode = #tpu.pipeline_mode<synchronous>, transform_indices = @transform_12, window_bounds = array<i64: 1, 32>}, {pipeline_mode = #tpu.pipeline_mode<synchronous>, transform_indices = @transform_13, window_bounds = array<i64: 1, 32>}, {pipeline_mode = #tpu.pipeline_mode<synchronous>, transform_indices = @transform_14, window_bounds = array<i64: 1, 32>}, {transform_indices = @transform_15, window_bounds = array<i64: 1, 8, 32>}]} {
    %c0 = arith.constant 0 : index
    %c0_0 = arith.constant 0 : index
    %c0_1 = arith.constant 0 : index
    %0 = vector.load %arg2[%c0, %c0_0, %c0_1] : memref<1x8x32xf32, #tpu.memory_space<vmem>>, vector<1x8x32xf32>
    %1 = vector.shape_cast %0 : vector<1x8x32xf32> to vector<8x32xf32>
    %2 = arith.truncf %1 : vector<8x32xf32> to vector<8x32xbf16>
    %c0_2 = arith.constant 0 : index
    %c0_3 = arith.constant 0 : index
    %3 = vector.load %arg5[%c0_2, %c0_3] : memref<32x32xbf16, #tpu.memory_space<vmem>>, vector<32x32xbf16>
    %cst = arith.constant dense<0.000000e+00> : vector<8x32xf32>
    %4 = tpu.matmul %2, %3, %cst {dimension_numbers = #tpu.dot_dimension_numbers<[1], [0], [0], [1], [0, 0, 1, 1], [], []>} : vector<8x32xbf16>, vector<32x32xbf16>, vector<8x32xf32> -> vector<8x32xf32>
    %c0_4 = arith.constant 0 : index
    %c0_5 = arith.constant 0 : index
    %5 = vector.load %arg6[%c0_4, %c0_5] : memref<1x32xf32, #tpu.memory_space<vmem>>, vector<1x32xf32>
    %6 = vector.broadcast %5 : vector<1x32xf32> to vector<8x32xf32>
    %7 = arith.addf %4, %6 : vector<8x32xf32>
    %cst_6 = arith.constant 0.353553385 : f32
    %8 = vector.broadcast %cst_6 : f32 to vector<8x32xf32>
    %9 = arith.mulf %7, %8 : vector<8x32xf32>
    %10 = arith.truncf %9 : vector<8x32xf32> to vector<8x32xbf16>
    %11 = vector.shape_cast %10 : vector<8x32xbf16> to vector<8x4x8xbf16>
    %12 = tpu.transpose %11, [1, 0, 2] : vector<8x4x8xbf16> -> vector<4x8x8xbf16>
    %c0_7 = arith.constant 0 : index
    %c0_8 = arith.constant 0 : index
    %c0_9 = arith.constant 0 : index
    %c0_10 = arith.constant 0 : index
    %13 = vector.load %arg3[%c0_7, %c0_8, %c0_9, %c0_10] : memref<1x4x8x8xbf16, #tpu.memory_space<vmem>>, vector<1x4x8x8xbf16>
    %14 = vector.shape_cast %13 : vector<1x4x8x8xbf16> to vector<4x8x8xbf16>
    %c0_11 = arith.constant 0 : index
    %c0_12 = arith.constant 0 : index
    %c0_13 = arith.constant 0 : index
    %c0_14 = arith.constant 0 : index
    %15 = vector.load %arg4[%c0_11, %c0_12, %c0_13, %c0_14] : memref<1x4x8x8xbf16, #tpu.memory_space<vmem>>, vector<1x4x8x8xbf16>
    %16 = vector.shape_cast %15 : vector<1x4x8x8xbf16> to vector<4x8x8xbf16>
    "tpu.trace_start"() <{level = 10 : i32, message = "hqd,hkd->hqk"}> : () -> ()
    %cst_15 = arith.constant dense<0.000000e+00> : vector<4x8x8xf32>
    %17 = tpu.matmul %12, %14, %cst_15 {dimension_numbers = #tpu.dot_dimension_numbers<[2], [2], [1], [1], [0, 0, 0, 1, 1, 1], [0], [0]>} : vector<4x8x8xbf16>, vector<4x8x8xbf16>, vector<4x8x8xf32> -> vector<4x8x8xf32>
    "tpu.trace_stop"() : () -> ()
    %cst_16 = arith.constant dense<0xFF800000> : vector<4x8xf32>
    %18 = vector.multi_reduction <maximumf>, %17, %cst_16 [2] : vector<4x8x8xf32> to vector<4x8xf32>
    %19 = vector.shape_cast %18 : vector<4x8xf32> to vector<4x8x1xf32>
    %20 = vector.broadcast %19 : vector<4x8x1xf32> to vector<4x8x8xf32>
    %21 = arith.subf %17, %20 : vector<4x8x8xf32>
    %22 = math.exp %21 : vector<4x8x8xf32>
    %cst_17 = arith.constant dense<0.000000e+00> : vector<4x8xf32>
    %23 = vector.multi_reduction <add>, %22, %cst_17 [2] : vector<4x8x8xf32> to vector<4x8xf32>
    %24 = vector.shape_cast %23 : vector<4x8xf32> to vector<4x8x1xf32>
    %25 = arith.truncf %22 : vector<4x8x8xf32> to vector<4x8x8xbf16>
    "tpu.trace_start"() <{level = 10 : i32, message = "hqk,hkd->hqd"}> : () -> ()
    %cst_18 = arith.constant dense<0.000000e+00> : vector<4x8x8xf32>
    %26 = tpu.matmul %25, %16, %cst_18 {dimension_numbers = #tpu.dot_dimension_numbers<[2], [1], [1], [2], [0, 0, 0, 1, 1, 2], [0], [0]>} : vector<4x8x8xbf16>, vector<4x8x8xbf16>, vector<4x8x8xf32> -> vector<4x8x8xf32>
    "tpu.trace_stop"() : () -> ()
    %27 = tpu.reciprocal %24 {approx = true} : vector<4x8x1xf32> -> vector<4x8x1xf32>
    %28 = vector.broadcast %27 : vector<4x8x1xf32> to vector<4x8x8xf32>
    %29 = arith.mulf %26, %28 : vector<4x8x8xf32>
    %30 = tpu.transpose %29, [1, 0, 2] : vector<4x8x8xf32> -> vector<8x4x8xf32>
    %31 = vector.shape_cast %30 : vector<8x4x8xf32> to vector<8x32xf32>
    %32 = arith.truncf %31 : vector<8x32xf32> to vector<8x32xbf16>
    %c0_19 = arith.constant 0 : index
    %c0_20 = arith.constant 0 : index
    %33 = vector.load %arg7[%c0_19, %c0_20] : memref<32x32xbf16, #tpu.memory_space<vmem>>, vector<32x32xbf16>
    %cst_21 = arith.constant dense<0.000000e+00> : vector<8x32xf32>
    %34 = tpu.matmul %32, %33, %cst_21 {dimension_numbers = #tpu.dot_dimension_numbers<[1], [0], [0], [1], [0, 0, 1, 1], [], []>} : vector<8x32xbf16>, vector<32x32xbf16>, vector<8x32xf32> -> vector<8x32xf32>
    %c0_22 = arith.constant 0 : index
    %c0_23 = arith.constant 0 : index
    %35 = vector.load %arg8[%c0_22, %c0_23] : memref<1x32xf32, #tpu.memory_space<vmem>>, vector<1x32xf32>
    %36 = vector.broadcast %35 : vector<1x32xf32> to vector<8x32xf32>
    %37 = arith.addf %34, %36 : vector<8x32xf32>
    %38 = arith.addf %1, %37 : vector<8x32xf32>
    %c0_24 = arith.constant 0 : index
    %c0_25 = arith.constant 0 : index
    %39 = vector.load %arg9[%c0_24, %c0_25] : memref<1x32xf32, #tpu.memory_space<vmem>>, vector<1x32xf32>
    %c0_26 = arith.constant 0 : index
    %c0_27 = arith.constant 0 : index
    %40 = vector.load %arg10[%c0_26, %c0_27] : memref<1x32xf32, #tpu.memory_space<vmem>>, vector<1x32xf32>
    %cst_28 = arith.constant dense<0.000000e+00> : vector<8xf32>
    %41 = vector.multi_reduction <add>, %38, %cst_28 [1] : vector<8x32xf32> to vector<8xf32>
    %42 = vector.shape_cast %41 : vector<8xf32> to vector<8x1xf32>
    %cst_29 = arith.constant 3.200000e+01 : f32
    %43 = vector.broadcast %cst_29 : f32 to vector<8x1xf32>
    %44 = arith.divf %42, %43 : vector<8x1xf32>
    %45 = vector.broadcast %44 : vector<8x1xf32> to vector<8x32xf32>
    %46 = arith.subf %38, %45 : vector<8x32xf32>
    %47 = arith.mulf %46, %46 : vector<8x32xf32>
    %cst_30 = arith.constant dense<0.000000e+00> : vector<8xf32>
    %48 = vector.multi_reduction <add>, %47, %cst_30 [1] : vector<8x32xf32> to vector<8xf32>
    %49 = vector.shape_cast %48 : vector<8xf32> to vector<8x1xf32>
    %cst_31 = arith.constant 3.200000e+01 : f32
    %50 = vector.broadcast %cst_31 : f32 to vector<8x1xf32>
    %51 = arith.divf %49, %50 : vector<8x1xf32>
    %cst_32 = arith.constant 9.99999974E-6 : f32
    %52 = vector.broadcast %cst_32 : f32 to vector<8x1xf32>
    %53 = arith.addf %51, %52 : vector<8x1xf32>
    %54 = math.rsqrt %53 : vector<8x1xf32>
    %55 = vector.broadcast %54 : vector<8x1xf32> to vector<8x32xf32>
    %56 = arith.mulf %46, %55 : vector<8x32xf32>
    %57 = vector.broadcast %39 : vector<1x32xf32> to vector<8x32xf32>
    %58 = arith.mulf %56, %57 : vector<8x32xf32>
    %59 = vector.broadcast %40 : vector<1x32xf32> to vector<8x32xf32>
    %60 = arith.addf %58, %59 : vector<8x32xf32>
    %61 = arith.truncf %60 : vector<8x32xf32> to vector<8x32xbf16>
    %c0_33 = arith.constant 0 : index
    %c0_34 = arith.constant 0 : index
    %62 = vector.load %arg11[%c0_33, %c0_34] : memref<32x64xbf16, #tpu.memory_space<vmem>>, vector<32x64xbf16>
    %cst_35 = arith.constant dense<0.000000e+00> : vector<8x64xf32>
    %63 = tpu.matmul %61, %62, %cst_35 {dimension_numbers = #tpu.dot_dimension_numbers<[1], [0], [0], [1], [0, 0, 1, 1], [], []>} : vector<8x32xbf16>, vector<32x64xbf16>, vector<8x64xf32> -> vector<8x64xf32>
    %c0_36 = arith.constant 0 : index
    %c0_37 = arith.constant 0 : index
    %64 = vector.load %arg12[%c0_36, %c0_37] : memref<1x64xf32, #tpu.memory_space<vmem>>, vector<1x64xf32>
    %65 = vector.broadcast %64 : vector<1x64xf32> to vector<8x64xf32>
    %66 = arith.addf %63, %65 : vector<8x64xf32>
    %cst_38 = arith.constant 0.000000e+00 : f32
    %67 = vector.broadcast %cst_38 : f32 to vector<8x64xf32>
    %68 = arith.maximumf %66, %67 : vector<8x64xf32>
    %69 = arith.truncf %68 : vector<8x64xf32> to vector<8x64xbf16>
    %c0_39 = arith.constant 0 : index
    %c0_40 = arith.constant 0 : index
    %70 = vector.load %arg13[%c0_39, %c0_40] : memref<64x32xbf16, #tpu.memory_space<vmem>>, vector<64x32xbf16>
    %cst_41 = arith.constant dense<0.000000e+00> : vector<8x32xf32>
    %71 = tpu.matmul %69, %70, %cst_41 {dimension_numbers = #tpu.dot_dimension_numbers<[1], [0], [0], [1], [0, 0, 1, 1], [], []>} : vector<8x64xbf16>, vector<64x32xbf16>, vector<8x32xf32> -> vector<8x32xf32>
    %c0_42 = arith.constant 0 : index
    %c0_43 = arith.constant 0 : index
    %72 = vector.load %arg14[%c0_42, %c0_43] : memref<1x32xf32, #tpu.memory_space<vmem>>, vector<1x32xf32>
    %73 = vector.broadcast %72 : vector<1x32xf32> to vector<8x32xf32>
    %74 = arith.addf %71, %73 : vector<8x32xf32>
    %75 = arith.addf %60, %74 : vector<8x32xf32>
    %c0_44 = arith.constant 0 : index
    %c0_45 = arith.constant 0 : index
    %76 = vector.load %arg15[%c0_44, %c0_45] : memref<1x32xf32, #tpu.memory_space<vmem>>, vector<1x32xf32>
    %c0_46 = arith.constant 0 : index
    %c0_47 = arith.constant 0 : index
    %77 = vector.load %arg16[%c0_46, %c0_47] : memref<1x32xf32, #tpu.memory_space<vmem>>, vector<1x32xf32>
    %cst_48 = arith.constant dense<0.000000e+00> : vector<8xf32>
    %78 = vector.multi_reduction <add>, %75, %cst_48 [1] : vector<8x32xf32> to vector<8xf32>
    %79 = vector.shape_cast %78 : vector<8xf32> to vector<8x1xf32>
    %cst_49 = arith.constant 3.200000e+01 : f32
    %80 = vector.broadcast %cst_49 : f32 to vector<8x1xf32>
    %81 = arith.divf %79, %80 : vector<8x1xf32>
    %82 = vector.broadcast %81 : vector<8x1xf32> to vector<8x32xf32>
    %83 = arith.subf %75, %82 : vector<8x32xf32>
    %84 = arith.mulf %83, %83 : vector<8x32xf32>
    %cst_50 = arith.constant dense<0.000000e+00> : vector<8xf32>
    %85 = vector.multi_reduction <add>, %84, %cst_50 [1] : vector<8x32xf32> to vector<8xf32>
    %86 = vector.shape_cast %85 : vector<8xf32> to vector<8x1xf32>
    %cst_51 = arith.constant 3.200000e+01 : f32
    %87 = vector.broadcast %cst_51 : f32 to vector<8x1xf32>
    %88 = arith.divf %86, %87 : vector<8x1xf32>
    %cst_52 = arith.constant 9.99999974E-6 : f32
    %89 = vector.broadcast %cst_52 : f32 to vector<8x1xf32>
    %90 = arith.addf %88, %89 : vector<8x1xf32>
    %91 = math.rsqrt %90 : vector<8x1xf32>
    %92 = vector.broadcast %91 : vector<8x1xf32> to vector<8x32xf32>
    %93 = arith.mulf %83, %92 : vector<8x32xf32>
    %94 = vector.broadcast %76 : vector<1x32xf32> to vector<8x32xf32>
    %95 = arith.mulf %93, %94 : vector<8x32xf32>
    %96 = vector.broadcast %77 : vector<1x32xf32> to vector<8x32xf32>
    %97 = arith.addf %95, %96 : vector<8x32xf32>
    %c0_53 = arith.constant 0 : index
    %c0_54 = arith.constant 0 : index
    %c0_55 = arith.constant 0 : index
    %98 = vector.load %arg17[%c0_53, %c0_54, %c0_55] : memref<1x8x32xf32, #tpu.memory_space<vmem>>, vector<1x8x32xf32>
    %99 = vector.shape_cast %98 : vector<1x8x32xf32> to vector<8x32xf32>
    %100 = vector.shape_cast %97 : vector<8x32xf32> to vector<1x8x32xf32>
    tpu.vector_store %arg17[%c0_53, %c0_54, %c0_55], %100 {strides = array<i32>} : memref<1x8x32xf32, #tpu.memory_space<vmem>>, vector<1x8x32xf32>,
    return
  }
  func.func @transform_0(%arg0: i32, %arg1: i32) -> (i32, i32, i32) {
    %c0_i32 = arith.constant 0 : i32
    %c0_i32_0 = arith.constant 0 : i32
    return %arg0, %arg1, %c0_i32 : i32, i32, i32
  }
  func.func @transform_1(%arg0: i32, %arg1: i32) -> (i32, i32, i32, i32) {
    %c0_i32 = arith.constant 0 : i32
    %c0_i32_0 = arith.constant 0 : i32
    %c0_i32_1 = arith.constant 0 : i32
    %c0_i32_2 = arith.constant 0 : i32
    return %arg0, %c0_i32, %c0_i32_0, %c0_i32_1 : i32, i32, i32, i32
  }
  func.func @transform_2(%arg0: i32, %arg1: i32) -> (i32, i32, i32, i32) {
    %c0_i32 = arith.constant 0 : i32
    %c0_i32_0 = arith.constant 0 : i32
    %c0_i32_1 = arith.constant 0 : i32
    %c0_i32_2 = arith.constant 0 : i32
    return %arg0, %c0_i32, %c0_i32_0, %c0_i32_1 : i32, i32, i32, i32
  }
  func.func @transform_3(%arg0: i32, %arg1: i32) -> (i32, i32) {
    %c0_i32 = arith.constant 0 : i32
    %c0_i32_0 = arith.constant 0 : i32
    %c0_i32_1 = arith.constant 0 : i32
    return %c0_i32, %c0_i32_0 : i32, i32
  }
  func.func @transform_4(%arg0: i32, %arg1: i32) -> (i32, i32) {
    %c0_i32 = arith.constant 0 : i32
    %c0_i32_0 = arith.constant 0 : i32
    %c0_i32_1 = arith.constant 0 : i32
    return %c0_i32, %c0_i32_0 : i32, i32
  }
  func.func @transform_5(%arg0: i32, %arg1: i32) -> (i32, i32) {
    %c0_i32 = arith.constant 0 : i32
    %c0_i32_0 = arith.constant 0 : i32
    %c0_i32_1 = arith.constant 0 : i32
    return %c0_i32, %c0_i32_0 : i32, i32
  }
  func.func @transform_6(%arg0: i32, %arg1: i32) -> (i32, i32) {
    %c0_i32 = arith.constant 0 : i32
    %c0_i32_0 = arith.constant 0 : i32
    %c0_i32_1 = arith.constant 0 : i32
    return %c0_i32, %c0_i32_0 : i32, i32
  }
  func.func @transform_7(%arg0: i32, %arg1: i32) -> (i32, i32) {
    %c0_i32 = arith.constant 0 : i32
    %c0_i32_0 = arith.constant 0 : i32
    %c0_i32_1 = arith.constant 0 : i32
    return %c0_i32, %c0_i32_0 : i32, i32
  }
  func.func @transform_8(%arg0: i32, %arg1: i32) -> (i32, i32) {
    %c0_i32 = arith.constant 0 : i32
    %c0_i32_0 = arith.constant 0 : i32
    %c0_i32_1 = arith.constant 0 : i32
    return %c0_i32, %c0_i32_0 : i32, i32
  }
  func.func @transform_9(%arg0: i32, %arg1: i32) -> (i32, i32) {
    %c0_i32 = arith.constant 0 : i32
    %c0_i32_0 = arith.constant 0 : i32
    %c0_i32_1 = arith.constant 0 : i32
    return %c0_i32, %c0_i32_0 : i32, i32
  }
  func.func @transform_10(%arg0: i32, %arg1: i32) -> (i32, i32) {
    %c0_i32 = arith.constant 0 : i32
    %c0_i32_0 = arith.constant 0 : i32
    %c0_i32_1 = arith.constant 0 : i32
    return %c0_i32, %c0_i32_0 : i32, i32
  }
  func.func @transform_11(%arg0: i32, %arg1: i32) -> (i32, i32) {
    %c0_i32 = arith.constant 0 : i32
    %c0_i32_0 = arith.constant 0 : i32
    %c0_i32_1 = arith.constant 0 : i32
    return %c0_i32, %c0_i32_0 : i32, i32
  }
  func.func @transform_12(%arg0: i32, %arg1: i32) -> (i32, i32) {
    %c0_i32 = arith.constant 0 : i32
    %c0_i32_0 = arith.constant 0 : i32
    %c0_i32_1 = arith.constant 0 : i32
    return %c0_i32, %c0_i32_0 : i32, i32
  }
  func.func @transform_13(%arg0: i32, %arg1: i32) -> (i32, i32) {
    %c0_i32 = arith.constant 0 : i32
    %c0_i32_0 = arith.constant 0 : i32
    %c0_i32_1 = arith.constant 0 : i32
    return %c0_i32, %c0_i32_0 : i32, i32
  }
  func.func @transform_14(%arg0: i32, %arg1: i32) -> (i32, i32) {
    %c0_i32 = arith.constant 0 : i32
    %c0_i32_0 = arith.constant 0 : i32
    %c0_i32_1 = arith.constant 0 : i32
    return %c0_i32, %c0_i32_0 : i32, i32
  }
  func.func @transform_15(%arg0: i32, %arg1: i32) -> (i32, i32, i32) {
    %c0_i32 = arith.constant 0 : i32
    %c0_i32_0 = arith.constant 0 : i32
    return %arg0, %arg1, %c0_i32 : i32, i32, i32
  }
}

</mosaic_0001>

<llo_original>
// kernel: tpu_custom_call.1
$region0: #{tpu_custom_call.1}
  #allocation0 [shape = 'u32[]', space=smem, size = 0x4, offset = 0x4, fixed_abs, tag = 'smem constant byte address 0x4 - core index']
  #allocation1 [shape = 'u32[72,128]{1,0:T(1,128)}', space=vmem, size = 0x9000, scoped, tag = 'internal scratch']
  %s0 = inlined_call_operand.vmem [shape: f32[2,8,32], index: 0, kind: input, shape index: {}]
  %s1 = inlined_call_operand.vmem [shape: bf16[2,4,8,8], index: 1, kind: input, shape index: {}]
  %s2 = inlined_call_operand.hbm [shape: bf16[2,4,8,8], index: 2, kind: input, shape index: {}]
  %s3 = inlined_call_operand.hbm [shape: bf16[32,32], index: 3, kind: input, shape index: {}]
  %s4 = inlined_call_operand.vmem [shape: f32[1,32], index: 4, kind: input, shape index: {}]
  %s5 = inlined_call_operand.hbm [shape: bf16[32,32], index: 5, kind: input, shape index: {}]
  %s6 = inlined_call_operand.vmem [shape: f32[1,32], index: 6, kind: input, shape index: {}]
  %s7 = inlined_call_operand.vmem [shape: f32[1,32], index: 7, kind: input, shape index: {}]
  %s8 = inlined_call_operand.vmem [shape: f32[1,32], index: 8, kind: input, shape index: {}]
  %s9 = inlined_call_operand.hbm [shape: bf16[32,64], index: 9, kind: input, shape index: {}]
  %s10 = inlined_call_operand.vmem [shape: f32[1,64], index: 10, kind: input, shape index: {}]
  %s11 = inlined_call_operand.vmem [shape: bf16[64,32], index: 11, kind: input, shape index: {}]
  %s12 = inlined_call_operand.vmem [shape: f32[1,32], index: 12, kind: input, shape index: {}]
  %s13 = inlined_call_operand.vmem [shape: f32[1,32], index: 13, kind: input, shape index: {}]
  %s14 = inlined_call_operand.vmem [shape: f32[1,32], index: 14, kind: input, shape index: {}]
  %s15 = inlined_call_operand.hbm [shape: f32[2,8,32], index: 15, kind: output, shape index: {}]
  %s16 = sld [smem:[#allocation0]]
  $region109: #{tpu_custom_call.1} parent=0
    _
  %s18 = ssub.s32 1, %s16
  %s19 = scalar_select 0, %s18, %s16
  $region1: #{tpu_custom_call.1} parent=0
    #allocation2 [shape = 'u8[16384]{0}', space=vmem, size = 0x4000, scoped, tag = 'input window, operand 2']
    #allocation3 [shape = 's32[2]{0}', space=sflag, size = 0x8, scoped, tag = 'scoped memory for tpu_custom_call.1']
    #allocation4 [shape = 's32[2]{0}', space=sflag, size = 0x8, scoped, tag = 'scoped memory for tpu_custom_call.1']
    #allocation5 [shape = 'u8[8192]{0}', space=vmem, size = 0x2000, scoped, tag = 'input window, operand 3, single buffered']
    #allocation6 [shape = 's32[1]{0}', space=sflag, size = 0x4, scoped, tag = 'scoped memory for tpu_custom_call.1']
    #allocation7 [shape = 'u8[8192]{0}', space=vmem, size = 0x2000, scoped, tag = 'input window, operand 5, single buffered']
    #allocation8 [shape = 'u8[8192]{0}', space=vmem, size = 0x2000, scoped, tag = 'input window, operand 9, single buffered']
    #allocation9 [shape = 's32[1]{0}', space=sflag, size = 0x4, scoped, tag = 'scoped memory for tpu_custom_call.1']
    #allocation10 [shape = 'u8[8192]{0}', space=vmem, size = 0x2000, scoped, tag = 'output window, operand 0']
    %20 = vsyncpa [#allocation3], 0
    %s21 = scalar_lea.sflag [#allocation3], 1
    %22 = vsyncpa %s21, 0
    %23 = vsyncpa [#allocation6], 0
    %24 = vsyncpa [#allocation9], 0
    %25 = vsyncpa [#allocation4], 0
    %s26 = scalar_lea.sflag [#allocation4], 1
    %27 = vsyncpa %s26, 0
    loop: start=0, step=1, limit=4
    $region2: #{tpu_custom_call.1} parent=1 // loop_pre_header
      _
    $region3: #{tpu_custom_call.1} parent=1 // loop_header
      %s29 = sphi 0, %s33
      %p30 = scmp.ge.s32.totalorder %s29, 4
      %s36 = sphi 0, %s48
      %s37 = sphi 0, %s44
      %s38 = sphi 0, %s36
      %s39 = sphi 0, %s37
      %s40 = sphi 0, %s38
      %s41 = sphi 0, %s39
      %s53 = sphi 0, %s55
      %s56 = sphi 0, %s53
      %s57 = sphi 0, %s56
      %s73 = sphi 0, %s57
      %s79 = sphi 0, %s81
      %s82 = sphi 0, %s79
      %s83 = sphi 0, %s82
      %s99 = sphi 0, %s83
      %s105 = sphi 0, %s107
      %s108 = sphi 0, %s105
      %s109 = sphi 0, %s108
      %s125 = sphi 0, %s109
      %s129 = sphi 0, %s129
      %s131 = sphi 0, %s129
      %s132 = sphi 0, %s131
      %s146 = sphi 0, %s132
      %s150 = sphi 0, %s150
      %s152 = sphi 0, %s150
      %s153 = sphi 0, %s152
      %s167 = sphi 0, %s153
      %s171 = sphi 0, %s171
      %s173 = sphi 0, %s171
      %s174 = sphi 0, %s173
      %s188 = sphi 0, %s174
      %s192 = sphi 0, %s192
      %s194 = sphi 0, %s192
      %s195 = sphi 0, %s194
      %s209 = sphi 0, %s195
      %s213 = sphi 0, %s213
      %s215 = sphi 0, %s213
      %s216 = sphi 0, %s215
      %s230 = sphi 0, %s216
      %s234 = sphi 0, %s234
      %s236 = sphi 0, %s234
      %s237 = sphi 0, %s236
      %s251 = sphi 0, %s237
      %s255 = sphi 0, %s255
      %s257 = sphi 0, %s255
      %s258 = sphi 0, %s257
      %s272 = sphi 0, %s258
      %s276 = sphi 0, %s276
      %s278 = sphi 0, %s276
      %s279 = sphi 0, %s278
      %s293 = sphi 0, %s279
      %s297 = sphi 0, %s297
      %s299 = sphi 0, %s297
      %s300 = sphi 0, %s299
      %s314 = sphi 0, %s300
      %s318 = sphi 0, %s318
      %s320 = sphi 0, %s318
      %s321 = sphi 0, %s320
      %s335 = sphi 0, %s321
      %s339 = sphi 0, %s339
      %s341 = sphi 0, %s339
      %s342 = sphi 0, %s341
      %s356 = sphi 0, %s342
      %s360 = sphi 0, %s360
      %s362 = sphi 0, %s360
      %s363 = sphi 0, %s362
      %s377 = sphi 0, %s363
      %s385 = sphi 0, %s387
      %s388 = sphi 0, %s385
      %s389 = sphi 0, %s388
      %s405 = sphi 0, %s389
    $region4: #{tpu_custom_call.1} parent=1 // loop_header_branch
      %32 = sbr.rel (%p30) target = $region8
    $region5: #{tpu_custom_call.1} parent=1 // loop_body
      %s34 = ssub.s32 %s29, 1
      %s35 = ssub.s32 %s29, 2
      %s42 = sadd.s32 1, %s37
      %p43 = scmp.ge.s32.totalorder %s42, 1
      %s44 = scalar_select %p43, 0, %s42
      %s45 = sadd.s32 1, %s36
      %s46 = scalar_select %p43, %s45, %s36
      %p47 = scmp.ge.s32.totalorder %s46, 2
      %s48 = scalar_select %p47, 0, %s46
      %s49 = ssub.s32 %s36, %s48
      %s50 = ssub.s32 %s37, %s44
      %s51 = sor.u32 %s49, %s50
      %p52 = scmp.eq.s32.totalorder %s51, 0
      %s54 = sadd.s32 %s53, 1
      %s55 = scalar_select %p52, %s53, %s54
      %p58 = pneg %p52
      %p59 = scmp.eq.s32.totalorder %s29, 1
      %p60 = por %p58, %p59
      %p61 = scmp.ne.s32.totalorder %s53, %s56
      %p62 = scmp.eq.s32.totalorder %s29, 0
      %p63 = por %p61, %p62
      %p64 = scmp.ne.s32.totalorder %s53, %s56
      %p65 = scmp.eq.s32.totalorder %s34, 1
      %p66 = por %p64, %p65
      %p67 = scmp.ne.s32.totalorder %s56, %s57
      %p68 = scmp.eq.s32.totalorder %s34, 0
      %p69 = por %p67, %p68
      %p70 = scmp.ne.s32.totalorder %s56, %s57
      %p71 = scmp.eq.s32.totalorder %s35, 1
      %p72 = por %p70, %p71
      %p74 = scmp.ne.s32.totalorder %s57, %s73
      %p75 = scmp.eq.s32.totalorder %s35, 0
      %p76 = por %p74, %p75
      %s77 = ssub.s32 %s36, %s48
      %p78 = scmp.eq.s32.totalorder %s77, 0
      %s80 = sadd.s32 %s79, 1
      %s81 = scalar_select %p78, %s79, %s80
      %p84 = pneg %p78
      %p85 = scmp.eq.s32.totalorder %s29, 1
      %p86 = por %p84, %p85
      %p87 = scmp.ne.s32.totalorder %s79, %s82
      %p88 = scmp.eq.s32.totalorder %s29, 0
      %p89 = por %p87, %p88
      %p90 = scmp.ne.s32.totalorder %s79, %s82
      %p91 = scmp.eq.s32.totalorder %s34, 1
      %p92 = por %p90, %p91
      %p93 = scmp.ne.s32.totalorder %s82, %s83
      %p94 = scmp.eq.s32.totalorder %s34, 0
      %p95 = por %p93, %p94
      %p96 = scmp.ne.s32.totalorder %s82, %s83
      %p97 = scmp.eq.s32.totalorder %s35, 1
      %p98 = por %p96, %p97
      %p100 = scmp.ne.s32.totalorder %s83, %s99
      %p101 = scmp.eq.s32.totalorder %s35, 0
      %p102 = por %p100, %p101
      %s103 = ssub.s32 %s36, %s48
      %p104 = scmp.eq.s32.totalorder %s103, 0
      %s106 = sadd.s32 %s105, 1
      %s107 = scalar_select %p104, %s105, %s106
      %p110 = pneg %p104
      %p111 = scmp.eq.s32.totalorder %s29, 1
      %p112 = por %p110, %p111
      %p113 = scmp.ne.s32.totalorder %s105, %s108
      %p114 = scmp.eq.s32.totalorder %s29, 0
      %p115 = por %p113, %p114
      %p116 = scmp.ne.s32.totalorder %s105, %s108
      %p117 = scmp.eq.s32.totalorder %s34, 1
      %p118 = por %p116, %p117
      %p119 = scmp.ne.s32.totalorder %s108, %s109
      %p120 = scmp.eq.s32.totalorder %s34, 0
      %p121 = por %p119, %p120
      %p122 = scmp.ne.s32.totalorder %s108, %s109
      %p123 = scmp.eq.s32.totalorder %s35, 1
      %p124 = por %p122, %p123
      %p126 = scmp.ne.s32.totalorder %s109, %s125
      %p127 = scmp.eq.s32.totalorder %s35, 0
      %p128 = por %p126, %p127
      %s130 = sadd.s32 %s129, 1
      %p133 = scmp.eq.s32.totalorder %s29, 1
      %p134 = scmp.ne.s32.totalorder %s129, %s131
      %p135 = scmp.eq.s32.totalorder %s29, 0
      %p136 = por %p134, %p135
      %p137 = scmp.ne.s32.totalorder %s129, %s131
      %p138 = scmp.eq.s32.totalorder %s34, 1
      %p139 = por %p137, %p138
      %p140 = scmp.ne.s32.totalorder %s131, %s132
      %p141 = scmp.eq.s32.totalorder %s34, 0
      %p142 = por %p140, %p141
      %p143 = scmp.ne.s32.totalorder %s131, %s132
      %p144 = scmp.eq.s32.totalorder %s35, 1
      %p145 = por %p143, %p144
      %p147 = scmp.ne.s32.totalorder %s132, %s146
      %p148 = scmp.eq.s32.totalorder %s35, 0
      %p149 = por %p147, %p148
      %s151 = sadd.s32 %s150, 1
      %p154 = scmp.eq.s32.totalorder %s29, 1
      %p155 = scmp.ne.s32.totalorder %s150, %s152
      %p156 = scmp.eq.s32.totalorder %s29, 0
      %p157 = por %p155, %p156
      %p158 = scmp.ne.s32.totalorder %s150, %s152
      %p159 = scmp.eq.s32.totalorder %s34, 1
      %p160 = por %p158, %p159
      %p161 = scmp.ne.s32.totalorder %s152, %s153
      %p162 = scmp.eq.s32.totalorder %s34, 0
      %p163 = por %p161, %p162
      %p164 = scmp.ne.s32.totalorder %s152, %s153
      %p165 = scmp.eq.s32.totalorder %s35, 1
      %p166 = por %p164, %p165
      %p168 = scmp.ne.s32.totalorder %s153, %s167
      %p169 = scmp.eq.s32.totalorder %s35, 0
      %p170 = por %p168, %p169
      %s172 = sadd.s32 %s171, 1
      %p175 = scmp.eq.s32.totalorder %s29, 1
      %p176 = scmp.ne.s32.totalorder %s171, %s173
      %p177 = scmp.eq.s32.totalorder %s29, 0
      %p178 = por %p176, %p177
      %p179 = scmp.ne.s32.totalorder %s171, %s173
      %p180 = scmp.eq.s32.totalorder %s34, 1
      %p181 = por %p179, %p180
      %p182 = scmp.ne.s32.totalorder %s173, %s174
      %p183 = scmp.eq.s32.totalorder %s34, 0
      %p184 = por %p182, %p183
      %p185 = scmp.ne.s32.totalorder %s173, %s174
      %p186 = scmp.eq.s32.totalorder %s35, 1
      %p187 = por %p185, %p186
      %p189 = scmp.ne.s32.totalorder %s174, %s188
      %p190 = scmp.eq.s32.totalorder %s35, 0
      %p191 = por %p189, %p190
      %s193 = sadd.s32 %s192, 1
      %p196 = scmp.eq.s32.totalorder %s29, 1
      %p197 = scmp.ne.s32.totalorder %s192, %s194
      %p198 = scmp.eq.s32.totalorder %s29, 0
      %p199 = por %p197, %p198
      %p200 = scmp.ne.s32.totalorder %s192, %s194
      %p201 = scmp.eq.s32.totalorder %s34, 1
      %p202 = por %p200, %p201
      %p203 = scmp.ne.s32.totalorder %s194, %s195
      %p204 = scmp.eq.s32.totalorder %s34, 0
      %p205 = por %p203, %p204
      %p206 = scmp.ne.s32.totalorder %s194, %s195
      %p207 = scmp.eq.s32.totalorder %s35, 1
      %p208 = por %p206, %p207
      %p210 = scmp.ne.s32.totalorder %s195, %s209
      %p211 = scmp.eq.s32.totalorder %s35, 0
      %p212 = por %p210, %p211
      %s214 = sadd.s32 %s213, 1
      %p217 = scmp.eq.s32.totalorder %s29, 1
      %p218 = scmp.ne.s32.totalorder %s213, %s215
      %p219 = scmp.eq.s32.totalorder %s29, 0
      %p220 = por %p218, %p219
      %p221 = scmp.ne.s32.totalorder %s213, %s215
      %p222 = scmp.eq.s32.totalorder %s34, 1
      %p223 = por %p221, %p222
      %p224 = scmp.ne.s32.totalorder %s215, %s216
      %p225 = scmp.eq.s32.totalorder %s34, 0
      %p226 = por %p224, %p225
      %p227 = scmp.ne.s32.totalorder %s215, %s216
      %p228 = scmp.eq.s32.totalorder %s35, 1
      %p229 = por %p227, %p228
      %p231 = scmp.ne.s32.totalorder %s216, %s230
      %p232 = scmp.eq.s32.totalorder %s35, 0
      %p233 = por %p231, %p232
      %s235 = sadd.s32 %s234, 1
      %p238 = scmp.eq.s32.totalorder %s29, 1
      %p239 = scmp.ne.s32.totalorder %s234, %s236
      %p240 = scmp.eq.s32.totalorder %s29, 0
      %p241 = por %p239, %p240
      %p242 = scmp.ne.s32.totalorder %s234, %s236
      %p243 = scmp.eq.s32.totalorder %s34, 1
      %p244 = por %p242, %p243
      %p245 = scmp.ne.s32.totalorder %s236, %s237
      %p246 = scmp.eq.s32.totalorder %s34, 0
      %p247 = por %p245, %p246
      %p248 = scmp.ne.s32.totalorder %s236, %s237
      %p249 = scmp.eq.s32.totalorder %s35, 1
      %p250 = por %p248, %p249
      %p252 = scmp.ne.s32.totalorder %s237, %s251
      %p253 = scmp.eq.s32.totalorder %s35, 0
      %p254 = por %p252, %p253
      %s256 = sadd.s32 %s255, 1
      %p259 = scmp.eq.s32.totalorder %s29, 1
      %p260 = scmp.ne.s32.totalorder %s255, %s257
      %p261 = scmp.eq.s32.totalorder %s29, 0
      %p262 = por %p260, %p261
      %p263 = scmp.ne.s32.totalorder %s255, %s257
      %p264 = scmp.eq.s32.totalorder %s34, 1
      %p265 = por %p263, %p264
      %p266 = scmp.ne.s32.totalorder %s257, %s258
      %p267 = scmp.eq.s32.totalorder %s34, 0
      %p268 = por %p266, %p267
      %p269 = scmp.ne.s32.totalorder %s257, %s258
      %p270 = scmp.eq.s32.totalorder %s35, 1
      %p271 = por %p269, %p270
      %p273 = scmp.ne.s32.totalorder %s258, %s272
      %p274 = scmp.eq.s32.totalorder %s35, 0
      %p275 = por %p273, %p274
      %s277 = sadd.s32 %s276, 1
      %p280 = scmp.eq.s32.totalorder %s29, 1
      %p281 = scmp.ne.s32.totalorder %s276, %s278
      %p282 = scmp.eq.s32.totalorder %s29, 0
      %p283 = por %p281, %p282
      %p284 = scmp.ne.s32.totalorder %s276, %s278
      %p285 = scmp.eq.s32.totalorder %s34, 1
      %p286 = por %p284, %p285
      %p287 = scmp.ne.s32.totalorder %s278, %s279
      %p288 = scmp.eq.s32.totalorder %s34, 0
      %p289 = por %p287, %p288
      %p290 = scmp.ne.s32.totalorder %s278, %s279
      %p291 = scmp.eq.s32.totalorder %s35, 1
      %p292 = por %p290, %p291
      %p294 = scmp.ne.s32.totalorder %s279, %s293
      %p295 = scmp.eq.s32.totalorder %s35, 0
      %p296 = por %p294, %p295
      %s298 = sadd.s32 %s297, 1
      %p301 = scmp.eq.s32.totalorder %s29, 1
      %p302 = scmp.ne.s32.totalorder %s297, %s299
      %p303 = scmp.eq.s32.totalorder %s29, 0
      %p304 = por %p302, %p303
      %p305 = scmp.ne.s32.totalorder %s297, %s299
      %p306 = scmp.eq.s32.totalorder %s34, 1
      %p307 = por %p305, %p306
      %p308 = scmp.ne.s32.totalorder %s299, %s300
      %p309 = scmp.eq.s32.totalorder %s34, 0
      %p310 = por %p308, %p309
      %p311 = scmp.ne.s32.totalorder %s299, %s300
      %p312 = scmp.eq.s32.totalorder %s35, 1
      %p313 = por %p311, %p312
      %p315 = scmp.ne.s32.totalorder %s300, %s314
      %p316 = scmp.eq.s32.totalorder %s35, 0
      %p317 = por %p315, %p316
      %s319 = sadd.s32 %s318, 1
      %p322 = scmp.eq.s32.totalorder %s29, 1
      %p323 = scmp.ne.s32.totalorder %s318, %s320
      %p324 = scmp.eq.s32.totalorder %s29, 0
      %p325 = por %p323, %p324
      %p326 = scmp.ne.s32.totalorder %s318, %s320
      %p327 = scmp.eq.s32.totalorder %s34, 1
      %p328 = por %p326, %p327
      %p329 = scmp.ne.s32.totalorder %s320, %s321
      %p330 = scmp.eq.s32.totalorder %s34, 0
      %p331 = por %p329, %p330
      %p332 = scmp.ne.s32.totalorder %s320, %s321
      %p333 = scmp.eq.s32.totalorder %s35, 1
      %p334 = por %p332, %p333
      %p336 = scmp.ne.s32.totalorder %s321, %s335
      %p337 = scmp.eq.s32.totalorder %s35, 0
      %p338 = por %p336, %p337
      %s340 = sadd.s32 %s339, 1
      %p343 = scmp.eq.s32.totalorder %s29, 1
      %p344 = scmp.ne.s32.totalorder %s339, %s341
      %p345 = scmp.eq.s32.totalorder %s29, 0
      %p346 = por %p344, %p345
      %p347 = scmp.ne.s32.totalorder %s339, %s341
      %p348 = scmp.eq.s32.totalorder %s34, 1
      %p349 = por %p347, %p348
      %p350 = scmp.ne.s32.totalorder %s341, %s342
      %p351 = scmp.eq.s32.totalorder %s34, 0
      %p352 = por %p350, %p351
      %p353 = scmp.ne.s32.totalorder %s341, %s342
      %p354 = scmp.eq.s32.totalorder %s35, 1
      %p355 = por %p353, %p354
      %p357 = scmp.ne.s32.totalorder %s342, %s356
      %p358 = scmp.eq.s32.totalorder %s35, 0
      %p359 = por %p357, %p358
      %s361 = sadd.s32 %s360, 1
      %p364 = scmp.eq.s32.totalorder %s29, 1
      %p365 = scmp.ne.s32.totalorder %s360, %s362
      %p366 = scmp.eq.s32.totalorder %s29, 0
      %p367 = por %p365, %p366
      %p368 = scmp.ne.s32.totalorder %s360, %s362
      %p369 = scmp.eq.s32.totalorder %s34, 1
      %p370 = por %p368, %p369
      %p371 = scmp.ne.s32.totalorder %s362, %s363
      %p372 = scmp.eq.s32.totalorder %s34, 0
      %p373 = por %p371, %p372
      %p374 = scmp.ne.s32.totalorder %s362, %s363
      %p375 = scmp.eq.s32.totalorder %s35, 1
      %p376 = por %p374, %p375
      %p378 = scmp.ne.s32.totalorder %s363, %s377
      %p379 = scmp.eq.s32.totalorder %s35, 0
      %p380 = por %p378, %p379
      %s381 = ssub.s32 %s36, %s48
      %s382 = ssub.s32 %s37, %s44
      %s383 = sor.u32 %s381, %s382
      %p384 = scmp.eq.s32.totalorder %s383, 0
      %s386 = sadd.s32 %s385, 1
      %s387 = scalar_select %p384, %s385, %s386
      %p390 = pneg %p384
      %p391 = scmp.eq.s32.totalorder %s29, 1
      %p392 = por %p390, %p391
      %p393 = scmp.ne.s32.totalorder %s385, %s388
      %p394 = scmp.eq.s32.totalorder %s29, 0
      %p395 = por %p393, %p394
      %p396 = scmp.ne.s32.totalorder %s385, %s388
      %p397 = scmp.eq.s32.totalorder %s34, 1
      %p398 = por %p396, %p397
      %p399 = scmp.ne.s32.totalorder %s388, %s389
      %p400 = scmp.eq.s32.totalorder %s34, 0
      %p401 = por %p399, %p400
      %p402 = scmp.ne.s32.totalorder %s388, %s389
      %p403 = scmp.eq.s32.totalorder %s35, 1
      %p404 = por %p402, %p403
      %p406 = scmp.ne.s32.totalorder %s389, %s405
      %p407 = scmp.eq.s32.totalorder %s35, 0
      %p408 = por %p406, %p407
      %p409 = scmp.le.s32.totalorder 1, %s29
      %p410 = scmp.lt.s32.totalorder %s29, 3
      %p411 = pnand %p409, %p410
      %p412 = pneg %p411
      // Predicated region
      $region9: #{tpu_custom_call.1} parent=5 // pred_check
        _
      $region10: #{tpu_custom_call.1} parent=5 // pred_check_branch
        %414 = sbr.rel (%p411) target = $region12
      $region11: #{tpu_custom_call.1} parent=5 // pred_region
        %s415 = ssub.s32 %s29, 1
        // Predicated region
        $region13: #{tpu_custom_call.1} parent=11 // pred_check
          %p416 = pneg %p142
        $region14: #{tpu_custom_call.1} parent=11 // pred_check_branch
          %418 = sbr.rel (%p416) target = $region16
        $region15: #{tpu_custom_call.1} parent=11 // pred_region
          %420 = vsyncadd [#allocation6], 0
          %s421 = sshll.u32 %s3, 4
          %s422 = int_to_ptr.hbm [resolvable:$true] %s421
          %s423 = sshll.u32 [#allocation5], 4
          %s424 = int_to_ptr.vmem [resolvable:$true] %s423
          %429 = dma.hbm_to_vmem [thread:$0]  %s422, 256, %s424, [#allocation6], 64, 64, 4
        $region16: #{tpu_custom_call.1} parent=11 // pred_fallthru
          _
        // Predicated region
        $region17: #{tpu_custom_call.1} parent=11 // pred_check
          %p430 = pneg %p163
        $region18: #{tpu_custom_call.1} parent=11 // pred_check_branch
          %432 = sbr.rel (%p430) target = $region20
        $region19: #{tpu_custom_call.1} parent=11 // pred_region
          _
        $region20: #{tpu_custom_call.1} parent=11 // pred_fallthru
          _
        // Predicated region
        $region21: #{tpu_custom_call.1} parent=11 // pred_check
          %p433 = pneg %p184
        $region22: #{tpu_custom_call.1} parent=11 // pred_check_branch
          %435 = sbr.rel (%p433) target = $region24
        $region23: #{tpu_custom_call.1} parent=11 // pred_region
          %437 = vsyncadd [#allocation6], 0
          %s438 = sshll.u32 %s5, 4
          %s439 = int_to_ptr.hbm [resolvable:$true] %s438
          %s440 = sshll.u32 [#allocation7], 4
          %s441 = int_to_ptr.vmem [resolvable:$true] %s440
          %446 = dma.hbm_to_vmem [thread:$0]  %s439, 256, %s441, [#allocation6], 64, 64, 4
        $region24: #{tpu_custom_call.1} parent=11 // pred_fallthru
          _
        // Predicated region
        $region25: #{tpu_custom_call.1} parent=11 // pred_check
          %p447 = pneg %p205
        $region26: #{tpu_custom_call.1} parent=11 // pred_check_branch
          %449 = sbr.rel (%p447) target = $region28
        $region27: #{tpu_custom_call.1} parent=11 // pred_region
          _
        $region28: #{tpu_custom_call.1} parent=11 // pred_fallthru
          _
        // Predicated region
        $region29: #{tpu_custom_call.1} parent=11 // pred_check
          %p450 = pneg %p226
        $region30: #{tpu_custom_call.1} parent=11 // pred_check_branch
          %452 = sbr.rel (%p450) target = $region32
        $region31: #{tpu_custom_call.1} parent=11 // pred_region
          _
        $region32: #{tpu_custom_call.1} parent=11 // pred_fallthru
          _
        // Predicated region
        $region33: #{tpu_custom_call.1} parent=11 // pred_check
          %p453 = pneg %p247
        $region34: #{tpu_custom_call.1} parent=11 // pred_check_branch
          %455 = sbr.rel (%p453) target = $region36
        $region35: #{tpu_custom_call.1} parent=11 // pred_region
          _
        $region36: #{tpu_custom_call.1} parent=11 // pred_fallthru
          _
        // Predicated region
        $region37: #{tpu_custom_call.1} parent=11 // pred_check
          %p456 = pneg %p268
        $region38: #{tpu_custom_call.1} parent=11 // pred_check_branch
          %458 = sbr.rel (%p456) target = $region40
        $region39: #{tpu_custom_call.1} parent=11 // pred_region
          %460 = vsyncadd [#allocation9], 0
          %s461 = sshll.u32 %s9, 4
          %s462 = int_to_ptr.hbm [resolvable:$true] %s461
          %s463 = sshll.u32 [#allocation8], 4
          %s464 = int_to_ptr.vmem [resolvable:$true] %s463
          %469 = dma.hbm_to_vmem [thread:$0]  %s462, 256, %s464, [#allocation9], 64, 64, 4
        $region40: #{tpu_custom_call.1} parent=11 // pred_fallthru
          _
        // Predicated region
        $region41: #{tpu_custom_call.1} parent=11 // pred_check
          %p470 = pneg %p289
        $region42: #{tpu_custom_call.1} parent=11 // pred_check_branch
          %472 = sbr.rel (%p470) target = $region44
        $region43: #{tpu_custom_call.1} parent=11 // pred_region
          _
        $region44: #{tpu_custom_call.1} parent=11 // pred_fallthru
          _
        // Predicated region
        $region45: #{tpu_custom_call.1} parent=11 // pred_check
          %p473 = pneg %p310
        $region46: #{tpu_custom_call.1} parent=11 // pred_check_branch
          %475 = sbr.rel (%p473) target = $region48
        $region47: #{tpu_custom_call.1} parent=11 // pred_region
          _
        $region48: #{tpu_custom_call.1} parent=11 // pred_fallthru
          _
        // Predicated region
        $region49: #{tpu_custom_call.1} parent=11 // pred_check
          %p476 = pneg %p331
        $region50: #{tpu_custom_call.1} parent=11 // pred_check_branch
          %478 = sbr.rel (%p476) target = $region52
        $region51: #{tpu_custom_call.1} parent=11 // pred_region
          _
        $region52: #{tpu_custom_call.1} parent=11 // pred_fallthru
          _
        // Predicated region
        $region53: #{tpu_custom_call.1} parent=11 // pred_check
          %p479 = pneg %p352
        $region54: #{tpu_custom_call.1} parent=11 // pred_check_branch
          %481 = sbr.rel (%p479) target = $region56
        $region55: #{tpu_custom_call.1} parent=11 // pred_region
          _
        $region56: #{tpu_custom_call.1} parent=11 // pred_fallthru
          _
        // Predicated region
        $region57: #{tpu_custom_call.1} parent=11 // pred_check
          %p482 = pneg %p373
        $region58: #{tpu_custom_call.1} parent=11 // pred_check_branch
          %484 = sbr.rel (%p482) target = $region60
        $region59: #{tpu_custom_call.1} parent=11 // pred_region
          _
        $region60: #{tpu_custom_call.1} parent=11 // pred_fallthru
          _
      $region12: #{tpu_custom_call.1} parent=5 // pred_fallthru
        _
      %p485 = scmp.lt.s32.totalorder %s29, 2
      // Predicated region
      $region61: #{tpu_custom_call.1} parent=5 // pred_check
        %p486 = pneg %p485
      $region62: #{tpu_custom_call.1} parent=5 // pred_check_branch
        %488 = sbr.rel (%p486) target = $region64
      $region63: #{tpu_custom_call.1} parent=5 // pred_region
        // Predicated region
        $region65: #{tpu_custom_call.1} parent=63 // pred_check
          %p489 = pneg %p63
        $region66: #{tpu_custom_call.1} parent=63 // pred_check_branch
          %491 = sbr.rel (%p489) target = $region68
        $region67: #{tpu_custom_call.1} parent=63 // pred_region
          %p492 = scmp.lt.s32.totalorder %s36, 1
          %s493 = scalar_select %p492, %s36, 1
          %p494 = scmp.lt.s32.totalorder %s37, 0
          %s495 = scalar_select %p494, %s37, 0
          %s496 = sadd.s32 %s495, %s493
          %s497 = smul.addr %s496, 8
          %s498 = scalar_lea.vmem %s0, %s497
        $region68: #{tpu_custom_call.1} parent=63 // pred_fallthru
          _
        // Predicated region
        $region69: #{tpu_custom_call.1} parent=63 // pred_check
          %p499 = pneg %p89
        $region70: #{tpu_custom_call.1} parent=63 // pred_check_branch
          %501 = sbr.rel (%p499) target = $region72
        $region71: #{tpu_custom_call.1} parent=63 // pred_region
          %p502 = scmp.lt.s32.totalorder %s36, 1
          %s503 = scalar_select %p502, %s36, 1
          %s504 = smul.addr %s503, 4
          %s505 = smul.addr %s504, 4
          %s506 = scalar_lea.vmem %s1, %s505
        $region72: #{tpu_custom_call.1} parent=63 // pred_fallthru
          _
        // Predicated region
        $region73: #{tpu_custom_call.1} parent=63 // pred_check
          %p507 = pneg %p115
        $region74: #{tpu_custom_call.1} parent=63 // pred_check_branch
          %509 = sbr.rel (%p507) target = $region76
        $region75: #{tpu_custom_call.1} parent=63 // pred_region
          %s510 = sand.u32 %s105, 1
          %s511 = scalar_lea.sflag [#allocation3], %s510
          %s512 = sand.u32 %s105, 1
          %s513 = smul.addr %s512, 16
          %s514 = scalar_lea.vmem [#allocation2], %s513
          %516 = vsyncadd %s511, 0
          %s517 = smul.addr %s36, 4
          %s518 = smul.addr %s517, 4
          %s519 = scalar_lea.hbm %s2, %s518
          %s520 = sshll.u32 %s519, 4
          %s521 = int_to_ptr.hbm [resolvable:$true] %s520
          %s522 = sshll.u32 %s514, 4
          %s523 = int_to_ptr.vmem [resolvable:$true] %s522
          %528 = dma.hbm_to_vmem [thread:$0]  %s521, 256, %s523, %s511, 64, 64, 4
        $region76: #{tpu_custom_call.1} parent=63 // pred_fallthru
          _
      $region64: #{tpu_custom_call.1} parent=5 // pred_fallthru
        _
      %p529 = scmp.le.s32.totalorder 1, %s29
      %p530 = scmp.lt.s32.totalorder %s29, 3
      %p531 = pnand %p529, %p530
      %p532 = pneg %p531
      // Predicated region
      $region77: #{tpu_custom_call.1} parent=5 // pred_check
        _
      $region78: #{tpu_custom_call.1} parent=5 // pred_check_branch
        %534 = sbr.rel (%p531) target = $region80
      $region79: #{tpu_custom_call.1} parent=5 // pred_region
        %s535 = ssub.s32 %s29, 1
        %s536 = sand.u32 %s108, 1
        %s537 = scalar_lea.sflag [#allocation3], %s536
        %s538 = sand.u32 %s108, 1
        %s539 = smul.addr %s538, 16
        %s540 = scalar_lea.vmem [#allocation2], %s539
        // Predicated region
        $region81: #{tpu_custom_call.1} parent=79 // pred_check
          %p541 = pneg %p121
        $region82: #{tpu_custom_call.1} parent=79 // pred_check_branch
          %543 = sbr.rel (%p541) target = $region84
        $region83: #{tpu_custom_call.1} parent=79 // pred_region
          %545 = dma.done %s537, 256
        $region84: #{tpu_custom_call.1} parent=79 // pred_fallthru
          _
        // Predicated region
        $region85: #{tpu_custom_call.1} parent=79 // pred_check
          %p546 = pneg %p142
        $region86: #{tpu_custom_call.1} parent=79 // pred_check_branch
          %548 = sbr.rel (%p546) target = $region88
        $region87: #{tpu_custom_call.1} parent=79 // pred_region
          %550 = dma.done [#allocation6], 256
        $region88: #{tpu_custom_call.1} parent=79 // pred_fallthru
          _
        // Predicated region
        $region89: #{tpu_custom_call.1} parent=79 // pred_check
          %p551 = pneg %p184
        $region90: #{tpu_custom_call.1} parent=79 // pred_check_branch
          %553 = sbr.rel (%p551) target = $region92
        $region91: #{tpu_custom_call.1} parent=79 // pred_region
          %555 = dma.done [#allocation6], 256
        $region92: #{tpu_custom_call.1} parent=79 // pred_fallthru
          _
        // Predicated region
        $region93: #{tpu_custom_call.1} parent=79 // pred_check
          %p556 = pneg %p268
        $region94: #{tpu_custom_call.1} parent=79 // pred_check_branch
          %558 = sbr.rel (%p556) target = $region96
        $region95: #{tpu_custom_call.1} parent=79 // pred_region
          %560 = dma.done [#allocation9], 256
        $region96: #{tpu_custom_call.1} parent=79 // pred_fallthru
          _
        %p561 = scmp.lt.s32.totalorder %s38, 1
        %s562 = scalar_select %p561, %s38, 1
        %p563 = scmp.lt.s32.totalorder %s39, 0
        %s564 = scalar_select %p563, %s39, 0
        %s565 = sadd.s32 %s564, %s562
        %s566 = smul.addr %s565, 8
        %s567 = scalar_lea.vmem %s0, %s566
        %p568 = pneg %p69
        %p569 = pneg %p66
        %p570 = scmp.lt.s32.totalorder %s38, 1
        %s571 = scalar_select %p570, %s38, 1
        %s572 = smul.addr %s571, 4
        %s573 = smul.addr %s572, 4
        %s574 = scalar_lea.vmem %s1, %s573
        %p575 = pneg %p95
        %p576 = pneg %p92
        %s577 = sand.u32 %s108, 1
        %s578 = scalar_lea.sflag [#allocation3], %s577
        %s579 = sand.u32 %s108, 1
        %s580 = smul.addr %s579, 16
        %s581 = scalar_lea.vmem [#allocation2], %s580
        %p582 = pneg %p121
        %p583 = pneg %p118
        %p584 = pneg %p142
        %p585 = pneg %p139
        %p586 = pneg %p163
        %p587 = pneg %p160
        %p588 = pneg %p184
        %p589 = pneg %p181
        %p590 = pneg %p205
        %p591 = pneg %p202
        %p592 = pneg %p226
        %p593 = pneg %p223
        %p594 = pneg %p247
        %p595 = pneg %p244
        %p596 = pneg %p268
        %p597 = pneg %p265
        %p598 = pneg %p289
        %p599 = pneg %p286
        %p600 = pneg %p310
        %p601 = pneg %p307
        %p602 = pneg %p331
        %p603 = pneg %p328
        %p604 = pneg %p352
        %p605 = pneg %p349
        %p606 = pneg %p373
        %p607 = pneg %p370
        %p608 = pneg %p401
        %p609 = pneg %p398
        %s610 = sand.u32 %s388, 1
        %s611 = scalar_lea.sflag [#allocation4], %s610
        %s612 = sand.u32 %s388, 1
        %s613 = smul.addr %s612, 8
        %s614 = scalar_lea.vmem [#allocation10], %s613
        %p615 = scmp.lt.s32.totalorder %s38, 1
        %s616 = scalar_select %p615, %s38, 1
        %p617 = scmp.lt.s32.totalorder %s39, 0
        %s618 = scalar_select %p617, %s39, 0
        %s619 = sadd.s32 %s618, %s616
        %s620 = smul.addr %s619, 8
        %s621 = scalar_lea.vmem %s0, %s620
        %p622 = scmp.lt.s32.totalorder %s38, 1
        %s623 = scalar_select %p622, %s38, 1
        %s624 = smul.addr %s623, 4
        %s625 = smul.addr %s624, 4
        %s626 = scalar_lea.vmem %s1, %s625
        %v628 = vld [vmem:[%s621] sm:$0xff]
        %v629 = vpack.c.bf16 %v628, %v628
        %v630 = vld [vmem:[#allocation5] sm:$0xf]
        %v631 = vld [vmem:[#allocation5 + $0x4] sm:$0xf]
        %v632 = vld [vmem:[#allocation5 + $0x8] sm:$0xf]
        %v633 = vld [vmem:[#allocation5 + $0xc] sm:$0xf]
        %v634 = vld [vmem:[%s4] sm:$0x1]
        %v636 = vperm.slane %v634, 0
        %v642 = vunpack.c.l.b16 %v630
        %v643 = vunpack.c.l.b16 %v631
        %v644 = vunpack.c.l.b16 %v632
        %v645 = vunpack.c.l.b16 %v633
        %v646 = vpack.c.b16 %v643, %v642
        %v647 = vpack.c.b16 %v645, %v644
        %vm650 = vcmask 261120
        %v652 = vsel %vm650, %v629, 0
        %654 = vmatpush.bf16.msra.mxu0 0
        %655 = vmatpush.bf16.msra.mxu0 0
        %656 = vmatpush.bf16.msra.mxu0 0
        %657 = vmatpush.bf16.msra.mxu0 0
        %658 = vmatpush.bf16.msra.mxu0 0
        %659 = vmatpush.bf16.msra.mxu0 0
        %660 = vmatpush.bf16.msra.mxu0 %v647
        %661 = vmatpush.bf16.msra.mxu0 %v646
        %662 = vmatmul.bf16.gmra.mxu0 %v652
        %v663 = vpop.f32.mrf.mxu0
        %v664 = vadd.f32 %v636, %v663
        %v665 = vpop.f32.mrf.mxu0
        %666 = vdwg.mxu0
        %v667 = vmul.f32 %v664, 0.35355338
        %v668 = vpack.c.bf16 %v667, %v667
        %670 = vrot.lane.b32.xlu0 %v668, 120
        %v671 = vpop.permute.xlu0 %670
        %672 = vrot.lane.b32.xlu0 %v668, 112
        %v673 = vpop.permute.xlu0 %672
        %674 = vrot.lane.b32.xlu0 %v668, 104
        %v675 = vpop.permute.xlu0 %674
        %v678 = vpack.i.b16 %v671, %v668
        %v679 = vshrl.u32 %v668, 16
        %v680 = vshrl.u32 %v671, 16
        %v681 = vpack.i.b16 %v680, %v679
        %v684 = vpack.i.b16 %v675, %v673
        %v685 = vshrl.u32 %v673, 16
        %v686 = vshrl.u32 %v675, 16
        %v687 = vpack.i.b16 %v686, %v685
        %v690 = vunpack.c.l.s4 1983009808
        %v691 = vunpack.c.0.s8 %v690
        %v692 = vperm.slane %v678, %v691
        %v695 = vunpack.c.l.s4 1983009808
        %v696 = vunpack.c.0.s8 %v695
        %v697 = vperm.slane %v684, %v696
        %v698 = vrot.slane %v697, 4
        %vm699 = vcmask 1047556
        %v700 = vsel %vm699, %v698, %v692
        %v701 = vrot.slane %v692, 4
        %v702 = vsel %vm699, %v697, %v701
        %v704 = vunpack.c.l.s4 1934713408
        %v705 = vunpack.c.0.s8 %v704
        %v706 = vperm.slane %v700, %v705
        %v708 = vunpack.c.l.s4 1934713408
        %v709 = vunpack.c.0.s8 %v708
        %v710 = vperm.slane %v702, %v709
        %v711 = vrot.slane %v706, 4
        %v712 = vsel %vm699, 0, %v711
        %v713 = vrot.slane %v710, 4
        %v714 = vsel %vm699, 0, %v713
        %v717 = vunpack.c.l.s4 1983009808
        %v718 = vunpack.c.0.s8 %v717
        %v719 = vperm.slane %v681, %v718
        %v722 = vunpack.c.l.s4 1983009808
        %v723 = vunpack.c.0.s8 %v722
        %v724 = vperm.slane %v687, %v723
        %v725 = vrot.slane %v724, 4
        %v726 = vsel %vm699, %v725, %v719
        %v727 = vrot.slane %v719, 4
        %v728 = vsel %vm699, %v724, %v727
        %v730 = vunpack.c.l.s4 1934713408
        %v731 = vunpack.c.0.s8 %v730
        %v732 = vperm.slane %v726, %v731
        %v734 = vunpack.c.l.s4 1934713408
        %v735 = vunpack.c.0.s8 %v734
        %v736 = vperm.slane %v728, %v735
        %v737 = vrot.slane %v732, 4
        %v738 = vsel %vm699, 0, %v737
        %v739 = vrot.slane %v736, 4
        %v740 = vsel %vm699, 0, %v739
        %v741 = vsel %vm699, %v713, %v706
        %v743 = vunpack.c.l.s4 1983009808
        %v744 = vunpack.c.0.s8 %v743
        %v745 = vperm.slane %v741, %v744
        %v746 = vrot.slane %v714, 4
        %v747 = vsel %vm699, %v746, %v712
        %v749 = vunpack.c.l.s4 1983009808
        %v750 = vunpack.c.0.s8 %v749
        %v751 = vperm.slane %v747, %v750
        %v752 = vrot.slane %v751, 4
        %v753 = vsel %vm699, %v752, %v745
        %v755 = vunpack.c.l.s4 1934713408
        %v756 = vunpack.c.0.s8 %v755
        %v757 = vperm.slane %v753, %v756
        %v758 = vrot.slane %v757, 4
        %v759 = vsel %vm699, 0, %v758
        %v760 = vsel %vm699, %v739, %v732
        %v762 = vunpack.c.l.s4 1983009808
        %v763 = vunpack.c.0.s8 %v762
        %v764 = vperm.slane %v760, %v763
        %v765 = vrot.slane %v740, 4
        %v766 = vsel %vm699, %v765, %v738
        %v768 = vunpack.c.l.s4 1983009808
        %v769 = vunpack.c.0.s8 %v768
        %v770 = vperm.slane %v766, %v769
        %v771 = vrot.slane %v770, 4
        %v772 = vsel %vm699, %v771, %v764
        %v774 = vunpack.c.l.s4 1934713408
        %v775 = vunpack.c.0.s8 %v774
        %v776 = vperm.slane %v772, %v775
        %v777 = vrot.slane %v776, 4
        %v778 = vsel %vm699, 0, %v777
        %v781 = vpack.i.b16 %v776, %v757
        %v782 = vshrl.u32 %v757, 16
        %v783 = vshrl.u32 %v776, 16
        %v784 = vpack.i.b16 %v783, %v782
        %v787 = vpack.i.b16 %v778, %v759
        %v788 = vshrl.u32 %v759, 16
        %v789 = vshrl.u32 %v778, 16
        %v790 = vpack.i.b16 %v789, %v788
        %v791 = vld [vmem:[%s626] sm:$0xf]
        %v792 = vld [vmem:[%s626 + $0x4] sm:$0xf]
        %v793 = vld [vmem:[%s626 + $0x8] sm:$0xf]
        %v794 = vld [vmem:[%s626 + $0xc] sm:$0xf]
        %v795 = vld [vmem:[%s540] sm:$0xf]
        %v796 = vld [vmem:[%s540 + $0x4] sm:$0xf]
        %v797 = vld [vmem:[%s540 + $0x8] sm:$0xf]
        %v798 = vld [vmem:[%s540 + $0xc] sm:$0xf]
        %vm799 = vcmask 64512
        %v801 = vsel %vm799, %v781, 0
        %v804 = vsel %vm799, %v791, 0
        %806 = vmatpush.bf16.xpose.msra.mxu0 0
        %807 = vmatpush.bf16.xpose.msra.mxu0 0
        %808 = vmatpush.bf16.xpose.msra.mxu0 0
        %809 = vmatpush.bf16.xpose.msra.mxu0 0
        %810 = vmatpush.bf16.xpose.msra.mxu0 0
        %811 = vmatpush.bf16.xpose.msra.mxu0 0
        %812 = vmatpush.bf16.xpose.msra.mxu0 0
        %813 = vmatpush.bf16.xpose.msra.mxu0 %v804
        %814 = vmatmul.bf16.gmra.mxu0 %v801
        %v815 = vpop.f32.mrf.mxu0
        %v816 = vadd.f32 0.0, %v815
        %v817 = vpop.f32.mrf.mxu0
        %818 = vdwg.mxu0
        %v820 = vsel %vm799, %v784, 0
        %v823 = vsel %vm799, %v792, 0
        %825 = vmatpush.bf16.xpose.msra.mxu0 0
        %826 = vmatpush.bf16.xpose.msra.mxu0 0
        %827 = vmatpush.bf16.xpose.msra.mxu0 0
        %828 = vmatpush.bf16.xpose.msra.mxu0 0
        %829 = vmatpush.bf16.xpose.msra.mxu0 0
        %830 = vmatpush.bf16.xpose.msra.mxu0 0
        %831 = vmatpush.bf16.xpose.msra.mxu0 0
        %832 = vmatpush.bf16.xpose.msra.mxu0 %v823
        %833 = vmatmul.bf16.gmra.mxu0 %v820
        %v834 = vpop.f32.mrf.mxu0
        %v835 = vadd.f32 0.0, %v834
        %v836 = vpop.f32.mrf.mxu0
        %837 = vdwg.mxu0
        %v839 = vsel %vm799, %v787, 0
        %v842 = vsel %vm799, %v793, 0
        %844 = vmatpush.bf16.xpose.msra.mxu0 0
        %845 = vmatpush.bf16.xpose.msra.mxu0 0
        %846 = vmatpush.bf16.xpose.msra.mxu0 0
        %847 = vmatpush.bf16.xpose.msra.mxu0 0
        %848 = vmatpush.bf16.xpose.msra.mxu0 0
        %849 = vmatpush.bf16.xpose.msra.mxu0 0
        %850 = vmatpush.bf16.xpose.msra.mxu0 0
        %851 = vmatpush.bf16.xpose.msra.mxu0 %v842
        %852 = vmatmul.bf16.gmra.mxu0 %v839
        %v853 = vpop.f32.mrf.mxu0
        %v854 = vadd.f32 0.0, %v853
        %v855 = vpop.f32.mrf.mxu0
        %856 = vdwg.mxu0
        %v858 = vsel %vm799, %v790, 0
        %v861 = vsel %vm799, %v794, 0
        %863 = vmatpush.bf16.xpose.msra.mxu0 0
        %864 = vmatpush.bf16.xpose.msra.mxu0 0
        %865 = vmatpush.bf16.xpose.msra.mxu0 0
        %866 = vmatpush.bf16.xpose.msra.mxu0 0
        %867 = vmatpush.bf16.xpose.msra.mxu0 0
        %868 = vmatpush.bf16.xpose.msra.mxu0 0
        %869 = vmatpush.bf16.xpose.msra.mxu0 0
        %870 = vmatpush.bf16.xpose.msra.mxu0 %v861
        %871 = vmatmul.bf16.gmra.mxu0 %v858
        %v872 = vpop.f32.mrf.mxu0
        %v873 = vadd.f32 0.0, %v872
        %v874 = vpop.f32.mrf.mxu0
        %875 = vdwg.mxu0
        %v876 = vsel %vm799, %v816, -inf
        %877 = vmax.xlane.f32.xlu0 %v876
        %v878 = vpop.xlane.xlu0 %877
        %v879 = vsel %vm799, %v835, -inf
        %880 = vmax.xlane.f32.xlu0 %v879
        %v881 = vpop.xlane.xlu0 %880
        %v882 = vsel %vm799, %v854, -inf
        %883 = vmax.xlane.f32.xlu0 %v882
        %v884 = vpop.xlane.xlu0 %883
        %v885 = vsel %vm799, %v873, -inf
        %886 = vmax.xlane.f32.xlu0 %v885
        %v887 = vpop.xlane.xlu0 %886
        %v888 = vsub.f32 %v816, %v878
        %v889 = vsub.f32 %v835, %v881
        %v890 = vsub.f32 %v854, %v884
        %v891 = vsub.f32 %v873, %v887
        %v892 = vmul.f32 %v888, 1.442695
        %v893 = vpow.pop %v892
        %v894 = vmul.f32 %v889, 1.442695
        %v895 = vpow.pop %v894
        %v896 = vmul.f32 %v890, 1.442695
        %v897 = vpow.pop %v896
        %v898 = vmul.f32 %v891, 1.442695
        %v899 = vpow.pop %v898
        %v900 = vsel %vm799, %v893, 0.0
        %901 = vadd.xlane.f32.xlu0 %v900
        %v902 = vpop.xlane.xlu0 %901
        %v903 = vsel %vm799, %v895, 0.0
        %904 = vadd.xlane.f32.xlu0 %v903
        %v905 = vpop.xlane.xlu0 %904
        %v906 = vsel %vm799, %v897, 0.0
        %907 = vadd.xlane.f32.xlu0 %v906
        %v908 = vpop.xlane.xlu0 %907
        %v909 = vsel %vm799, %v899, 0.0
        %910 = vadd.xlane.f32.xlu0 %v909
        %v911 = vpop.xlane.xlu0 %910
        %v912 = vpack.c.bf16 %v893, %v893
        %v913 = vpack.c.bf16 %v895, %v895
        %v914 = vpack.c.bf16 %v897, %v897
        %v915 = vpack.c.bf16 %v899, %v899
        %v917 = vsel %vm799, %v912, 0
        %vm919 = vcmask 1043456
        %v921 = vsel %vm919, %v795, 0
        %923 = vmatpush.bf16.msra.mxu0 0
        %924 = vmatpush.bf16.msra.mxu0 0
        %925 = vmatpush.bf16.msra.mxu0 0
        %926 = vmatpush.bf16.msra.mxu0 0
        %927 = vmatpush.bf16.msra.mxu0 0
        %928 = vmatpush.bf16.msra.mxu0 0
        %929 = vmatpush.bf16.msra.mxu0 0
        %930 = vmatpush.bf16.msra.mxu0 %v921
        %931 = vmatmul.bf16.gmra.mxu0 %v917
        %v932 = vpop.f32.mrf.mxu0
        %v933 = vadd.f32 0.0, %v932
        %v934 = vpop.f32.mrf.mxu0
        %935 = vdwg.mxu0
        %v937 = vsel %vm799, %v913, 0
        %v940 = vsel %vm919, %v796, 0
        %942 = vmatpush.bf16.msra.mxu0 0
        %943 = vmatpush.bf16.msra.mxu0 0
        %944 = vmatpush.bf16.msra.mxu0 0
        %945 = vmatpush.bf16.msra.mxu0 0
        %946 = vmatpush.bf16.msra.mxu0 0
        %947 = vmatpush.bf16.msra.mxu0 0
        %948 = vmatpush.bf16.msra.mxu0 0
        %949 = vmatpush.bf16.msra.mxu0 %v940
        %950 = vmatmul.bf16.gmra.mxu0 %v937
        %v951 = vpop.f32.mrf.mxu0
        %v952 = vadd.f32 0.0, %v951
        %v953 = vpop.f32.mrf.mxu0
        %954 = vdwg.mxu0
        %v956 = vsel %vm799, %v914, 0
        %v959 = vsel %vm919, %v797, 0
        %961 = vmatpush.bf16.msra.mxu0 0
        %962 = vmatpush.bf16.msra.mxu0 0
        %963 = vmatpush.bf16.msra.mxu0 0
        %964 = vmatpush.bf16.msra.mxu0 0
        %965 = vmatpush.bf16.msra.mxu0 0
        %966 = vmatpush.bf16.msra.mxu0 0
        %967 = vmatpush.bf16.msra.mxu0 0
        %968 = vmatpush.bf16.msra.mxu0 %v959
        %969 = vmatmul.bf16.gmra.mxu0 %v956
        %v970 = vpop.f32.mrf.mxu0
        %v971 = vadd.f32 0.0, %v970
        %v972 = vpop.f32.mrf.mxu0
        %973 = vdwg.mxu0
        %v975 = vsel %vm799, %v915, 0
        %v978 = vsel %vm919, %v798, 0
        %980 = vmatpush.bf16.msra.mxu0 0
        %981 = vmatpush.bf16.msra.mxu0 0
        %982 = vmatpush.bf16.msra.mxu0 0
        %983 = vmatpush.bf16.msra.mxu0 0
        %984 = vmatpush.bf16.msra.mxu0 0
        %985 = vmatpush.bf16.msra.mxu0 0
        %986 = vmatpush.bf16.msra.mxu0 0
        %987 = vmatpush.bf16.msra.mxu0 %v978
        %988 = vmatmul.bf16.gmra.mxu0 %v975
        %v989 = vpop.f32.mrf.mxu0
        %v990 = vadd.f32 0.0, %v989
        %v991 = vpop.f32.mrf.mxu0
        %992 = vdwg.mxu0
        %v993 = vrcp.pop %v902
        %v994 = vrcp.pop %v905
        %v995 = vrcp.pop %v908
        %v996 = vrcp.pop %v911
        %v997 = vmul.f32 %v933, %v993
        %v998 = vmul.f32 %v952, %v994
        %v999 = vmul.f32 %v971, %v995
        %v1000 = vmul.f32 %v990, %v996
        %v1001 = vrot.slane %v999, 4
        %vm1002 = vcmask 1047556
        %v1003 = vsel %vm1002, %v1001, %v997
        %v1004 = vrot.slane %v997, 4
        %v1005 = vsel %vm1002, %v999, %v1004
        %v1007 = vunpack.c.l.s4 1983009808
        %v1008 = vunpack.c.0.s8 %v1007
        %v1009 = vperm.slane %v1003, %v1008
        %v1011 = vunpack.c.l.s4 1983009808
        %v1012 = vunpack.c.0.s8 %v1011
        %v1013 = vperm.slane %v1005, %v1012
        %v1014 = vrot.slane %v1000, 4
        %v1015 = vsel %vm1002, %v1014, %v998
        %v1016 = vrot.slane %v998, 4
        %v1017 = vsel %vm1002, %v1000, %v1016
        %v1019 = vunpack.c.l.s4 1983009808
        %v1020 = vunpack.c.0.s8 %v1019
        %v1021 = vperm.slane %v1015, %v1020
        %v1023 = vunpack.c.l.s4 1983009808
        %v1024 = vunpack.c.0.s8 %v1023
        %v1025 = vperm.slane %v1017, %v1024
        %v1026 = vrot.slane %v1021, 4
        %v1027 = vsel %vm1002, %v1026, %v1009
        %v1028 = vrot.slane %v1009, 4
        %v1029 = vsel %vm1002, %v1021, %v1028
        %v1031 = vunpack.c.l.s4 1934713408
        %v1032 = vunpack.c.0.s8 %v1031
        %v1033 = vperm.slane %v1027, %v1032
        %v1035 = vunpack.c.l.s4 1934713408
        %v1036 = vunpack.c.0.s8 %v1035
        %v1037 = vperm.slane %v1029, %v1036
        %v1038 = vrot.slane %v1025, 4
        %v1039 = vsel %vm1002, %v1038, %v1013
        %v1040 = vrot.slane %v1013, 4
        %v1041 = vsel %vm1002, %v1025, %v1040
        %v1043 = vunpack.c.l.s4 1934713408
        %v1044 = vunpack.c.0.s8 %v1043
        %v1045 = vperm.slane %v1039, %v1044
        %v1047 = vunpack.c.l.s4 1934713408
        %v1048 = vunpack.c.0.s8 %v1047
        %v1049 = vperm.slane %v1041, %v1048
        %v1050 = vrot.slane %v1033, 4
        %v1051 = vsel %vm1002, 0.0, %v1050
        %v1052 = vrot.slane %v1037, 4
        %v1053 = vsel %vm1002, 0.0, %v1052
        %v1054 = vrot.slane %v1045, 4
        %v1055 = vsel %vm1002, 0.0, %v1054
        %v1056 = vrot.slane %v1049, 4
        %v1057 = vsel %vm1002, 0.0, %v1056
        %v1058 = vsel %vm1002, %v1052, %v1033
        %v1060 = vunpack.c.l.s4 1983009808
        %v1061 = vunpack.c.0.s8 %v1060
        %v1062 = vperm.slane %v1058, %v1061
        %v1063 = vrot.slane %v1053, 4
        %v1064 = vsel %vm1002, %v1063, %v1051
        %v1066 = vunpack.c.l.s4 1983009808
        %v1067 = vunpack.c.0.s8 %v1066
        %v1068 = vperm.slane %v1064, %v1067
        %v1069 = vsel %vm1002, %v1056, %v1045
        %v1071 = vunpack.c.l.s4 1983009808
        %v1072 = vunpack.c.0.s8 %v1071
        %v1073 = vperm.slane %v1069, %v1072
        %v1074 = vrot.slane %v1057, 4
        %v1075 = vsel %vm1002, %v1074, %v1055
        %v1077 = vunpack.c.l.s4 1983009808
        %v1078 = vunpack.c.0.s8 %v1077
        %v1079 = vperm.slane %v1075, %v1078
        %v1080 = vrot.slane %v1068, 4
        %v1081 = vsel %vm1002, %v1080, %v1062
        %v1082 = vrot.slane %v1062, 4
        %v1083 = vsel %vm1002, %v1068, %v1082
        %v1085 = vunpack.c.l.s4 1934713408
        %v1086 = vunpack.c.0.s8 %v1085
        %v1087 = vperm.slane %v1081, %v1086
        %v1089 = vunpack.c.l.s4 1934713408
        %v1090 = vunpack.c.0.s8 %v1089
        %v1091 = vperm.slane %v1083, %v1090
        %v1092 = vrot.slane %v1079, 4
        %v1093 = vsel %vm1002, %v1092, %v1073
        %v1094 = vrot.slane %v1073, 4
        %v1095 = vsel %vm1002, %v1079, %v1094
        %v1097 = vunpack.c.l.s4 1934713408
        %v1098 = vunpack.c.0.s8 %v1097
        %v1099 = vperm.slane %v1093, %v1098
        %v1101 = vunpack.c.l.s4 1934713408
        %v1102 = vunpack.c.0.s8 %v1101
        %v1103 = vperm.slane %v1095, %v1102
        %v1104 = vrot.slane %v1099, 4
        %v1105 = vsel %vm1002, %v1104, %v1087
        %v1106 = vrot.slane %v1087, 4
        %v1107 = vsel %vm1002, %v1099, %v1106
        %v1108 = vrot.slane %v1103, 4
        %v1109 = vsel %vm1002, %v1108, %v1091
        %v1110 = vrot.slane %v1091, 4
        %v1111 = vsel %vm1002, %v1103, %v1110
        %1113 = vrot.lane.b32.xlu0 %v1107, 8
        %v1114 = vpop.permute.xlu0 %1113
        %1117 = vrot.lane.b32.xlu0 %v1109, 16
        %v1118 = vpop.permute.xlu0 %1117
        %1121 = vrot.lane.b32.xlu0 %v1111, 24
        %v1122 = vpop.permute.xlu0 %1121
        %v1124 = vsel %vm799, %v1105, %v1114
        %vm1125 = vcmask 130048
        %v1126 = vsel %vm1125, %v1124, %v1118
        %vm1127 = vcmask 195584
        %v1128 = vsel %vm1127, %v1126, %v1122
        %v1129 = vpack.c.bf16 %v1128, %v1128
        %v1130 = vld [vmem:[#allocation7] sm:$0xf]
        %v1131 = vld [vmem:[#allocation7 + $0x4] sm:$0xf]
        %v1132 = vld [vmem:[#allocation7 + $0x8] sm:$0xf]
        %v1133 = vld [vmem:[#allocation7 + $0xc] sm:$0xf]
        %v1134 = vld [vmem:[%s6] sm:$0x1]
        %v1136 = vperm.slane %v1134, 0
        %v1142 = vunpack.c.l.b16 %v1130
        %v1143 = vunpack.c.l.b16 %v1131
        %v1144 = vunpack.c.l.b16 %v1132
        %v1145 = vunpack.c.l.b16 %v1133
        %v1146 = vpack.c.b16 %v1143, %v1142
        %v1147 = vpack.c.b16 %v1145, %v1144
        %v1151 = vsel %vm650, %v1129, 0
        %1153 = vmatpush.bf16.msra.mxu0 0
        %1154 = vmatpush.bf16.msra.mxu0 0
        %1155 = vmatpush.bf16.msra.mxu0 0
        %1156 = vmatpush.bf16.msra.mxu0 0
        %1157 = vmatpush.bf16.msra.mxu0 0
        %1158 = vmatpush.bf16.msra.mxu0 0
        %1159 = vmatpush.bf16.msra.mxu0 %v1147
        %1160 = vmatpush.bf16.msra.mxu0 %v1146
        %1161 = vmatmul.bf16.gmra.mxu0 %v1151
        %v1162 = vpop.f32.mrf.mxu0
        %v1163 = vadd.f32 %v1136, %v1162
        %v1164 = vpop.f32.mrf.mxu0
        %1165 = vdwg.mxu0
        %v1166 = vadd.f32 %v628, %v1163
        %v1167 = vld [vmem:[%s7] sm:$0x1]
        %v1168 = vld [vmem:[%s8] sm:$0x1]
        %v1169 = vsel %vm650, %v1166, 0.0
        %1170 = vadd.xlane.f32.xlu0 %v1169
        %v1171 = vpop.xlane.xlu0 %1170
        %v1172 = vrcp.pop 32.0
        %v1173 = vmul.f32 32.0, %v1172
        %v1174 = vsub.f32 1.0, %v1173
        %v1175 = vmul.f32 %v1172, %v1174
        %v1176 = vadd.f32 %v1172, %v1175
        %vm1177 = vweird.f32 %v1172
        %v1178 = vsel %vm1177, %v1172, %v1176
        %v1179 = vmul.f32 %v1171, %v1178
        %v1180 = vsub.f32 %v1166, %v1179
        %v1181 = vmul.f32 %v1180, %v1180
        %v1182 = vsel %vm650, %v1181, 0.0
        %1183 = vadd.xlane.f32.xlu0 %v1182
        %v1184 = vpop.xlane.xlu0 %1183
        %v1185 = vmul.f32 %v1184, %v1178
        %v1186 = vadd.f32 %v1185, 1e-05
        %v1187 = vrsqrt.pop %v1186
        %v1188 = vmul.f32 %v1187, %v1186
        %v1189 = vmul.f32 %v1188, %v1187
        %v1190 = vmul.f32 0.5, %v1189
        %v1191 = vsub.f32 1.5, %v1190
        %v1192 = vmul.f32 %v1187, %v1191
        %vm1193 = vweird.f32 %v1186
        %vm1194 = vweird.f32 %v1187
        %vm1195 = vmor %vm1193, %vm1194
        %v1196 = vsel %vm1195, %v1187, %v1192
        %v1197 = vmul.f32 %v1180, %v1196
        %v1199 = vperm.slane %v1167, 0
        %v1201 = vmul.f32 %v1197, %v1199
        %v1203 = vperm.slane %v1168, 0
        %v1205 = vadd.f32 %v1201, %v1203
        %v1206 = vpack.c.bf16 %v1205, %v1205
        %v1207 = vld [vmem:[#allocation8] sm:$0xf]
        %v1208 = vld [vmem:[#allocation8 + $0x4] sm:$0xf]
        %v1209 = vld [vmem:[#allocation8 + $0x8] sm:$0xf]
        %v1210 = vld [vmem:[#allocation8 + $0xc] sm:$0xf]
        %v1211 = vld [vmem:[%s10] sm:$0x1]
        %v1213 = vperm.slane %v1211, 0
        %v1219 = vunpack.c.l.b16 %v1207
        %v1220 = vunpack.c.l.b16 %v1208
        %v1221 = vunpack.c.l.b16 %v1209
        %v1222 = vunpack.c.l.b16 %v1210
        %v1223 = vpack.c.b16 %v1220, %v1219
        %v1224 = vpack.c.b16 %v1222, %v1221
        %v1228 = vsel %vm650, %v1206, 0
        %1230 = vmatpush.bf16.msra.mxu0 0
        %1231 = vmatpush.bf16.msra.mxu0 0
        %1232 = vmatpush.bf16.msra.mxu0 0
        %1233 = vmatpush.bf16.msra.mxu0 0
        %1234 = vmatpush.bf16.msra.mxu0 0
        %1235 = vmatpush.bf16.msra.mxu0 0
        %1236 = vmatpush.bf16.msra.mxu0 %v1224
        %1237 = vmatpush.bf16.msra.mxu0 %v1223
        %1238 = vmatmul.bf16.gmra.mxu0 %v1228
        %v1239 = vpop.f32.mrf.mxu0
        %v1240 = vadd.f32 %v1213, %v1239
        %v1241 = vpop.f32.mrf.mxu0
        %1242 = vdwg.mxu0
        %v1243 = vmax.f32 %v1240, 0.0
        %v1244 = vpack.c.bf16 %v1243, %v1243
        %v1245 = vld [vmem:[%s11] sm:$0xf]
        %v1246 = vld [vmem:[%s11 + $0x4] sm:$0xf]
        %v1247 = vld [vmem:[%s11 + $0x8] sm:$0xf]
        %v1248 = vld [vmem:[%s11 + $0xc] sm:$0xf]
        %v1249 = vld [vmem:[%s11 + $0x10] sm:$0xf]
        %v1250 = vld [vmem:[%s11 + $0x14] sm:$0xf]
        %v1251 = vld [vmem:[%s11 + $0x18] sm:$0xf]
        %v1252 = vld [vmem:[%s11 + $0x1c] sm:$0xf]
        %v1253 = vld [vmem:[%s12] sm:$0x1]
        %v1255 = vperm.slane %v1253, 0
        %v1265 = vunpack.c.l.b16 %v1245
        %v1266 = vunpack.c.l.b16 %v1246
        %v1267 = vunpack.c.l.b16 %v1247
        %v1268 = vunpack.c.l.b16 %v1248
        %v1269 = vunpack.c.l.b16 %v1249
        %v1270 = vunpack.c.l.b16 %v1250
        %v1271 = vunpack.c.l.b16 %v1251
        %v1272 = vunpack.c.l.b16 %v1252
        %v1273 = vpack.c.b16 %v1266, %v1265
        %v1274 = vpack.c.b16 %v1268, %v1267
        %v1275 = vpack.c.b16 %v1270, %v1269
        %v1276 = vpack.c.b16 %v1272, %v1271
        %vm1281 = vcmask 523264
        %v1283 = vsel %vm1281, %v1244, 0
        %1285 = vmatpush.bf16.msra.mxu0 0
        %1286 = vmatpush.bf16.msra.mxu0 0
        %1287 = vmatpush.bf16.msra.mxu0 0
        %1288 = vmatpush.bf16.msra.mxu0 0
        %1289 = vmatpush.bf16.msra.mxu0 %v1276
        %1290 = vmatpush.bf16.msra.mxu0 %v1275
        %1291 = vmatpush.bf16.msra.mxu0 %v1274
        %1292 = vmatpush.bf16.msra.mxu0 %v1273
        %1293 = vmatmul.bf16.gmra.mxu0 %v1283
        %v1294 = vpop.f32.mrf.mxu0
        %v1295 = vadd.f32 %v1255, %v1294
        %v1296 = vpop.f32.mrf.mxu0
        %1297 = vdwg.mxu0
        %v1298 = vadd.f32 %v1205, %v1295
        %v1299 = vld [vmem:[%s13] sm:$0x1]
        %v1300 = vld [vmem:[%s14] sm:$0x1]
        %v1301 = vsel %vm650, %v1298, 0.0
        %1302 = vadd.xlane.f32.xlu0 %v1301
        %v1303 = vpop.xlane.xlu0 %1302
        %v1304 = vmul.f32 %v1303, %v1178
        %v1305 = vsub.f32 %v1298, %v1304
        %v1306 = vmul.f32 %v1305, %v1305
        %v1307 = vsel %vm650, %v1306, 0.0
        %1308 = vadd.xlane.f32.xlu0 %v1307
        %v1309 = vpop.xlane.xlu0 %1308
        %v1310 = vmul.f32 %v1309, %v1178
        %v1311 = vadd.f32 %v1310, 1e-05
        %v1312 = vrsqrt.pop %v1311
        %v1313 = vmul.f32 %v1312, %v1311
        %v1314 = vmul.f32 %v1313, %v1312
        %v1315 = vmul.f32 0.5, %v1314
        %v1316 = vsub.f32 1.5, %v1315
        %v1317 = vmul.f32 %v1312, %v1316
        %vm1318 = vweird.f32 %v1311
        %vm1319 = vweird.f32 %v1312
        %vm1320 = vmor %vm1318, %vm1319
        %v1321 = vsel %vm1320, %v1312, %v1317
        %v1322 = vmul.f32 %v1305, %v1321
        %v1324 = vperm.slane %v1299, 0
        %v1326 = vmul.f32 %v1322, %v1324
        %v1328 = vperm.slane %v1300, 0
        %v1330 = vadd.f32 %v1326, %v1328
        %1331 = vst.msk [vmem:[%s614] sm:$0xff] %vm650, %v1330
        %s1332 = sand.u32 %s388, 1
        %s1333 = scalar_lea.sflag [#allocation4], %s1332
        %s1334 = sand.u32 %s388, 1
        %s1335 = smul.addr %s1334, 8
        %s1336 = scalar_lea.vmem [#allocation10], %s1335
        // Predicated region
        $region97: #{tpu_custom_call.1} parent=79 // pred_check
          %p1337 = pneg %p398
        $region98: #{tpu_custom_call.1} parent=79 // pred_check_branch
          %1339 = sbr.rel (%p1337) target = $region100
        $region99: #{tpu_custom_call.1} parent=79 // pred_region
          %1341 = vsyncadd %s1333, 0
          %s1342 = sadd.s32 %s39, %s38
          %s1343 = smul.addr %s1342, 8
          %s1344 = scalar_lea.hbm %s15, %s1343
          %s1346 = sshll.u32 %s1336, 4
          %s1347 = int_to_ptr.vmem [resolvable:$true] %s1346
          %s1348 = sshll.u32 %s1344, 4
          %s1349 = int_to_ptr.hbm [resolvable:$true] %s1348
          %1351 = dma.vmem_to_hbm [thread:$0]  %s1347, 128, %s1349, %s1333
        $region100: #{tpu_custom_call.1} parent=79 // pred_fallthru
          _
      $region80: #{tpu_custom_call.1} parent=5 // pred_fallthru
        _
      %p1352 = scmp.le.s32.totalorder 2, %s29
      // Predicated region
      $region101: #{tpu_custom_call.1} parent=5 // pred_check
        %p1353 = pneg %p1352
      $region102: #{tpu_custom_call.1} parent=5 // pred_check_branch
        %1355 = sbr.rel (%p1353) target = $region104
      $region103: #{tpu_custom_call.1} parent=5 // pred_region
        %s1356 = ssub.s32 %s29, 2
        // Predicated region
        $region105: #{tpu_custom_call.1} parent=103 // pred_check
          %p1357 = pneg %p404
        $region106: #{tpu_custom_call.1} parent=103 // pred_check_branch
          %1359 = sbr.rel (%p1357) target = $region108
        $region107: #{tpu_custom_call.1} parent=103 // pred_region
          %s1360 = sand.u32 %s389, 1
          %s1361 = scalar_lea.sflag [#allocation4], %s1360
          %s1362 = sand.u32 %s389, 1
          %s1363 = smul.addr %s1362, 8
          %s1364 = scalar_lea.vmem [#allocation10], %s1363
          %1366 = dma.done %s1361, 128
        $region108: #{tpu_custom_call.1} parent=103 // pred_fallthru
          _
      $region104: #{tpu_custom_call.1} parent=5 // pred_fallthru
        _
    $region6: #{tpu_custom_call.1} parent=1 // loop_footer
      %s33 = sadd.s32 1, %s29
    $region7: #{tpu_custom_call.1} parent=1 // loop_footer_branch
      %28 = sbr.rel target = $region3
    $region8: #{tpu_custom_call.1} parent=1 // loop_exit
      _
    %1367 = vsyncpa [#allocation3], 1
    %s1368 = scalar_lea.sflag [#allocation3], 1
    %1369 = vsyncpa %s1368, 1
    %1370 = vsyncpa [#allocation6], 1
    %1371 = vsyncpa [#allocation9], 1
    %1372 = vsyncpa [#allocation4], 1
    %s1373 = scalar_lea.sflag [#allocation4], 1
    %1374 = vsyncpa %s1373, 1

</llo_original>
